<compile_context>
chip_gen: v5e
topology: v5e:2x2
jax: 0.10.0
libtpu: 0.0.40
codegen_flags: <defaults>
</compile_context>

<pallas_src>
import functools

import jax
import jax.numpy as jnp
from jax.experimental import pallas as pl
from jax.experimental.pallas import tpu as pltpu

SELU_ALPHA = 1.6732632423543772848170429916717
SELU_SCALE = 1.0507009873554804934193349852946
MOMENTUM = 0.985
EPS = 1e-5


def _round_up(a, b):
    return -(-a // b) * b


def _selu(x):
    neg = SELU_ALPHA * (jnp.exp(jnp.minimum(x, 0.0)) - 1.0)
    return SELU_SCALE * jnp.where(x > 0, x, neg)


# --------------------------------------------------------------------------- #
# Pallas kernel: one batch element per grid step, arrays are (C, L).
# --------------------------------------------------------------------------- #
def sepdensenet_kernel(x_ref, w1_ref, b1_ref, w2_ref, b2_ref, w3_ref, b3_ref,
                       w4_ref, b4_ref, g1_ref, be1_ref, g2_ref, be2_ref,
                       out_ref, hp_ref, *, kernel_size, dilation, channel_norm,
                       start, seq_len, c_out):
    L = seq_len
    pad = ((kernel_size - 1) * dilation) // 2
    x = x_ref[...]                                        # (Cin, L) float32

    def dw_conv(h, w_ref, b_ref):
        # Depthwise "same" dilated conv.  Padded activation lives in the
        # lane-aligned VMEM scratch hp_ref; each tap is a static L-wide slice
        # load + MAC.  No (L + 2*pad)-lane values are built in registers.
        C = h.shape[0]
        cd = hp_ref.dtype
        hp_ref[...] = jnp.zeros_like(hp_ref)              # zero pad margins
        hp_ref[0:C, start:start + L] = h.astype(cd)
        w = w_ref[...].astype(cd)                         # (C, K)
        parts = []                                        # 4 partial sums: ILP
        for k in range(kernel_size):
            off = start - pad + k * dilation              # static, >= 0
            t = hp_ref[0:C, off:off + L] * w[:, k:k + 1]
            if len(parts) < 4:
                parts.append(t)
            else:
                parts[k % 4] = parts[k % 4] + t
        acc = parts[0]
        for p in parts[1:]:
            acc = acc + p
        return acc.astype(jnp.float32) + b_ref[...]       # bias (C, 1)

    def pw_conv(h, w_ref, b_ref):
        # Pointwise 1x1 conv == one plain 2D MXU matmul with the shared weight.
        return jnp.dot(w_ref[...], h,
                       preferred_element_type=jnp.float32) + b_ref[...]

    def normalizer(h, scale_ref, bias_ref):
        # torch Normalizer.forward, training=True, fresh buffers.
        if channel_norm:
            C = h.shape[0]
            mu = jnp.mean(h, axis=0, keepdims=True)                        # (1, L)
            var = jnp.sum((h - mu) ** 2, axis=0, keepdims=True) / (C - 1)  # unbiased
            h = (h - mu) * jax.lax.rsqrt(var + 1e-12)
        new_mean = jnp.mean(h, axis=1, keepdims=True)                      # (C, 1)
        h = h - (1.0 - MOMENTUM) * new_mean            # momentum*0 + (1-m)*newMean
        new_var = jnp.mean(h * h, axis=1, keepdims=True)
        mov_var = MOMENTUM + (1.0 - MOMENTUM) * new_var  # momentum*1 + (1-m)*newVar
        h = h * jax.lax.rsqrt(mov_var)                   # mov_var >= momentum > 0
        return h * jnp.abs(scale_ref[...]) + bias_ref[...]
        # TODO(synk): PyTorch persists updated movingAverage/movingVariance
        # buffers; that stateful write-back is dropped in this pure kernel.

    h = pw_conv(dw_conv(x, w1_ref, b1_ref), w2_ref, b2_ref)
    h = _selu(normalizer(h, g1_ref, be1_ref))
    h = pw_conv(dw_conv(h, w3_ref, b3_ref), w4_ref, b4_ref)
    y = _selu(normalizer(h, g2_ref, be2_ref))

    # torch.cat((y, x), dim=1): two lane-dense sub-stores.
    out_ref[0:c_out, :] = y
    out_ref[c_out:c_out + x.shape[0], :] = x


# --------------------------------------------------------------------------- #
# Wrapper
# --------------------------------------------------------------------------- #
def seperable_densenet_unit(x, params, *, kernel_size, dilation,
                            channel_norm=True, compute_dtype=jnp.float32):
    """x: (N, Cin, L) float32 -> (N, Cout + Cin, L) float32.

    compute_dtype=jnp.bfloat16 runs the depthwise MAC chain in bf16 (use on
    v6e/v7x only; keep float32 on v5e).  L should preferably be a multiple of
    128 for lane-dense stores; correctness does not depend on it.
    """
    N, Cin, L = x.shape
    w1, b1, w2, b2, w3, b3, w4, b4, g1, be1, g2, be2 = params
    C4 = w2.shape[0]
    Cout = w4.shape[0]

    pad = ((kernel_size - 1) * dilation) // 2
    start = _round_up(pad, 128)                   # lane-aligned placement of h
    Lpad = _round_up(start + L + pad, 128)        # scratch width
    Cmax = max(Cin, C4)

    weights = (
        w1.reshape(Cin, kernel_size), b1.reshape(Cin, 1),
        w2.reshape(C4, Cin), b2.reshape(C4, 1),
        w3.reshape(C4, kernel_size), b3.reshape(C4, 1),
        w4.reshape(Cout, C4), b4.reshape(Cout, 1),
        g1.reshape(C4, 1), be1.reshape(C4, 1),
        g2.reshape(Cout, 1), be2.reshape(Cout, 1),
    )

    kernel = functools.partial(
        sepdensenet_kernel, kernel_size=kernel_size, dilation=dilation,
        channel_norm=channel_norm, start=start, seq_len=L, c_out=Cout)

    out = pl.pallas_call(
        kernel,
        out_shape=jax.ShapeDtypeStruct((N, Cout + Cin, L), jnp.float32),
        grid=(N,),
        in_specs=[pl.BlockSpec((None, Cin, L), lambda n: (n, 0, 0))]
                 + [pl.BlockSpec(p.shape, lambda n: (0, 0)) for p in weights],
        out_specs=pl.BlockSpec((None, Cout + Cin, L), lambda n: (n, 0, 0)),
        scratch_shapes=[pltpu.VMEM((Cmax, Lpad), compute_dtype)],
        compiler_params=pltpu.CompilerParams(
            dimension_semantics=("parallel",),        # batch elements independent
            vmem_limit_bytes=48 * 1024 * 1024,        # < v7x 64 MiB physical
        ),
    )(x, *weights)
    return out


# --------------------------------------------------------------------------- #
# Pure-JAX reference (torch-faithful divides) for verification
# --------------------------------------------------------------------------- #
def _normalizer_ref(x, scale, bias, channel_norm):
    if channel_norm:
        mu = jnp.mean(x, axis=1, keepdims=True)
        std = jnp.sqrt(jnp.sum((x - mu) ** 2, axis=1, keepdims=True)
                       / (x.shape[1] - 1))
        x = (x - mu) / (std + EPS)
    new_mean = jnp.mean(x, axis=2, keepdims=True)
    x = x - (1.0 - MOMENTUM) * new_mean
    new_var = jnp.mean(x * x, axis=2, keepdims=True)
    mov_var = MOMENTUM + (1.0 - MOMENTUM) * new_var
    x = x / (jnp.sqrt(mov_var) + EPS)
    return x * jnp.abs(scale.reshape(1, -1, 1)) + bias.reshape(1, -1, 1)


def seperable_densenet_unit_ref(x, params, *, kernel_size, dilation,
                                channel_norm=True):
    w1, b1, w2, b2, w3, b3, w4, b4, g1, be1, g2, be2 = params
    _, _, L = x.shape
    pad = ((kernel_size - 1) * dilation) // 2

    def dw(h, w, b):
        hp = jnp.pad(h, ((0, 0), (0, 0), (pad, pad)))
        acc = jnp.zeros_like(h)
        for k in range(kernel_size):
            off = k * dilation
            acc = acc + hp[:, :, off:off + L] * w[None, :, k:k + 1]
        return acc + b.reshape(1, -1, 1)

    def pw(h, w, b):
        return jnp.einsum('oc,ncl->nol', w, h) + b.reshape(1, -1, 1)

    h = pw(dw(x, w1, b1), w2, b2)
    h = _selu(_normalizer_ref(h, g1, be1, channel_norm))
    h = pw(dw(h, w3, b3), w4, b4)
    y = _selu(_normalizer_ref(h, g2, be2, channel_norm))
    return jnp.concatenate([y, x], axis=1)


# --------------------------------------------------------------------------- #
# Parameter construction (weight_norm folded in)
# --------------------------------------------------------------------------- #
def init_params(key, in_channels, out_channels, kernel_size):
    C4 = 4 * out_channels
    ks = jax.random.split(key, 12)

    def weight_norm(v, kg):
        norm = jnp.sqrt(jnp.sum(v * v, axis=tuple(range(1, v.ndim)),
                                keepdims=True))
        g = jax.random.uniform(kg, (v.shape[0],) + (1,) * (v.ndim - 1),
                               minval=0.5, maxval=1.5, dtype=jnp.float32)
        return g * v / norm

    f32 = jnp.float32
    v1 = jax.random.normal(ks[0], (in_channels, 1, kernel_size), f32) * 0.5
    w1 = weight_norm(v1, ks[1]).reshape(in_channels, kernel_size)
    b1 = jax.random.normal(ks[2], (in_channels,), f32) * 0.1
    v2 = jax.random.normal(ks[3], (C4, in_channels, 1), f32) * 0.5
    w2 = weight_norm(v2, ks[4]).reshape(C4, in_channels)
    b2 = jax.random.normal(ks[5], (C4,), f32) * 0.1
    v3 = jax.random.normal(ks[6], (C4, 1, kernel_size), f32) * 0.5
    w3 = weight_norm(v3, ks[7]).reshape(C4, kernel_size)
    b3 = jax.random.normal(ks[8], (C4,), f32) * 0.1
    v4 = jax.random.normal(ks[9], (out_channels, C4, 1), f32) * 0.5
    w4 = weight_norm(v4, ks[10]).reshape(out_channels, C4)
    b4 = jax.random.normal(ks[11], (out_channels,), f32) * 0.1
    g1, be1 = jnp.ones((C4,), f32), jnp.zeros((C4,), f32)      # PyTorch init
    g2, be2 = jnp.ones((out_channels,), f32), jnp.zeros((out_channels,), f32)
    return (w1, b1, w2, b2, w3, b3, w4, b4, g1, be1, g2, be2)


if __name__ == "__main__":
    key = jax.random.PRNGKey(0)
    N, L = 8, 128      # 8 grid steps (>=2 fills both v7x TCs); L lane-dense

    # (Cin, Cout, kernel_size, dilation, channel_norm): a dsMod-style unit
    # (channelNorm=False) and a denseMod-style dilated unit (channelNorm=True),
    # at small shapes consistent with the module (numSignals=12).
    configs = [
        (12, 8, 9, 1, False),
        (20, 8, 9, 2, True),
    ]
    for i, (Cin, Cout, K, dil, cn) in enumerate(configs):
        kx, kp, key = jax.random.split(key, 3)
        x = jax.random.normal(kx, (N, Cin, L), dtype=jnp.float32)
        params = init_params(kp, Cin, Cout, K)

        y = seperable_densenet_unit(x, params, kernel_size=K, dilation=dil,
                                    channel_norm=cn)
        y = jax.block_until_ready(y)
        assert y.shape == (N, Cout + Cin, L), (i, y.shape)
        assert bool(jnp.all(jnp.isfinite(y))), i
        # Dense concat: the last Cin channels must be the input, bit-exact.
        assert bool(jnp.array_equal(y[:, Cout:, :], x)), i
        # Compare against the pure-JAX reference (rsqrt vs /(sqrt+eps) and
        # default-precision matmuls on both sides -> loose tolerance).
        y_ref = seperable_densenet_unit_ref(x, params, kernel_size=K,
                                            dilation=dil, channel_norm=cn)
        err = float(jnp.max(jnp.abs(y - y_ref)))
        assert bool(jnp.allclose(y, y_ref, rtol=5e-2, atol=5e-2)), (i, err)

    print("KERNEL_OK")
</pallas_src>

<mosaic_0001>
module attributes {stable_mosaic.version = 11 : i64} {
  func.func @sepdensenet_kernel(%arg0: i32, %arg1: memref<1x12x128xf32, #tpu.memory_space<vmem>>, %arg2: memref<12x9xf32, #tpu.memory_space<vmem>>, %arg3: memref<12x1xf32, #tpu.memory_space<vmem>>, %arg4: memref<32x12xf32, #tpu.memory_space<vmem>>, %arg5: memref<32x1xf32, #tpu.memory_space<vmem>>, %arg6: memref<32x9xf32, #tpu.memory_space<vmem>>, %arg7: memref<32x1xf32, #tpu.memory_space<vmem>>, %arg8: memref<8x32xf32, #tpu.memory_space<vmem>>, %arg9: memref<8x1xf32, #tpu.memory_space<vmem>>, %arg10: memref<32x1xf32, #tpu.memory_space<vmem>>, %arg11: memref<32x1xf32, #tpu.memory_space<vmem>>, %arg12: memref<8x1xf32, #tpu.memory_space<vmem>>, %arg13: memref<8x1xf32, #tpu.memory_space<vmem>>, %arg14: memref<1x20x128xf32, #tpu.memory_space<vmem>>, %arg15: memref<32x384xf32, #tpu.memory_space<vmem>>) attributes {dimension_semantics = [#tpu.dimension_semantics<parallel>], iteration_bounds = array<i64: 8>, scalar_prefetch = 0 : i64, scratch_operands = 1 : i64, tpu.core_type = #tpu.core_type<tc>, window_params = [{transform_indices = @transform_0, window_bounds = array<i64: 1, 12, 128>}, {pipeline_mode = #tpu.pipeline_mode<synchronous>, transform_indices = @transform_1, window_bounds = array<i64: 12, 9>}, {pipeline_mode = #tpu.pipeline_mode<synchronous>, transform_indices = @transform_2, window_bounds = array<i64: 12, 1>}, {pipeline_mode = #tpu.pipeline_mode<synchronous>, transform_indices = @transform_3, window_bounds = array<i64: 32, 12>}, {pipeline_mode = #tpu.pipeline_mode<synchronous>, transform_indices = @transform_4, window_bounds = array<i64: 32, 1>}, {pipeline_mode = #tpu.pipeline_mode<synchronous>, transform_indices = @transform_5, window_bounds = array<i64: 32, 9>}, {pipeline_mode = #tpu.pipeline_mode<synchronous>, transform_indices = @transform_6, window_bounds = array<i64: 32, 1>}, {pipeline_mode = #tpu.pipeline_mode<synchronous>, transform_indices = @transform_7, window_bounds = array<i64: 8, 32>}, {pipeline_mode = #tpu.pipeline_mode<synchronous>, transform_indices = @transform_8, window_bounds = array<i64: 8, 1>}, {pipeline_mode = #tpu.pipeline_mode<synchronous>, transform_indices = @transform_9, window_bounds = array<i64: 32, 1>}, {pipeline_mode = #tpu.pipeline_mode<synchronous>, transform_indices = @transform_10, window_bounds = array<i64: 32, 1>}, {pipeline_mode = #tpu.pipeline_mode<synchronous>, transform_indices = @transform_11, window_bounds = array<i64: 8, 1>}, {pipeline_mode = #tpu.pipeline_mode<synchronous>, transform_indices = @transform_12, window_bounds = array<i64: 8, 1>}, {transform_indices = @transform_13, window_bounds = array<i64: 1, 20, 128>}]} {
    %c0 = arith.constant 0 : index
    %c0_0 = arith.constant 0 : index
    %c0_1 = arith.constant 0 : index
    %0 = vector.load %arg1[%c0, %c0_0, %c0_1] : memref<1x12x128xf32, #tpu.memory_space<vmem>>, vector<1x12x128xf32>
    %1 = vector.shape_cast %0 : vector<1x12x128xf32> to vector<12x128xf32>
    %cst = arith.constant 0.000000e+00 : f32
    %2 = vector.broadcast %cst : f32 to vector<32x384xf32>
    %c0_2 = arith.constant 0 : index
    %c0_3 = arith.constant 0 : index
    %3 = vector.load %arg15[%c0_2, %c0_3] : memref<32x384xf32, #tpu.memory_space<vmem>>, vector<32x384xf32>
    tpu.vector_store %arg15[%c0_2, %c0_3], %2 {strides = array<i32>} : memref<32x384xf32, #tpu.memory_space<vmem>>, vector<32x384xf32>,
    %c0_4 = arith.constant 0 : index
    %c128 = arith.constant 128 : index
    %4 = vector.load %arg15[%c0_4, %c128] : memref<32x384xf32, #tpu.memory_space<vmem>>, vector<12x128xf32>
    tpu.vector_store %arg15[%c0_4, %c128], %1 {strides = array<i32>} : memref<32x384xf32, #tpu.memory_space<vmem>>, vector<12x128xf32>,
    %c0_5 = arith.constant 0 : index
    %c0_6 = arith.constant 0 : index
    %5 = vector.load %arg2[%c0_5, %c0_6] : memref<12x9xf32, #tpu.memory_space<vmem>>, vector<12x9xf32>
    %c0_7 = arith.constant 0 : index
    %c124 = arith.constant 124 : index
    %6 = vector.load %arg15[%c0_7, %c124] : memref<32x384xf32, #tpu.memory_space<vmem>>, vector<12x128xf32>
    %7 = vector.extract_strided_slice %5 {offsets = [0, 0], sizes = [12, 1], strides = [1, 1]} : vector<12x9xf32> to vector<12x1xf32>
    %8 = vector.broadcast %7 : vector<12x1xf32> to vector<12x128xf32>
    %9 = arith.mulf %6, %8 : vector<12x128xf32>
    %c0_8 = arith.constant 0 : index
    %c125 = arith.constant 125 : index
    %10 = vector.load %arg15[%c0_8, %c125] : memref<32x384xf32, #tpu.memory_space<vmem>>, vector<12x128xf32>
    %11 = vector.extract_strided_slice %5 {offsets = [0, 1], sizes = [12, 1], strides = [1, 1]} : vector<12x9xf32> to vector<12x1xf32>
    %12 = vector.broadcast %11 : vector<12x1xf32> to vector<12x128xf32>
    %13 = arith.mulf %10, %12 : vector<12x128xf32>
    %c0_9 = arith.constant 0 : index
    %c126 = arith.constant 126 : index
    %14 = vector.load %arg15[%c0_9, %c126] : memref<32x384xf32, #tpu.memory_space<vmem>>, vector<12x128xf32>
    %15 = vector.extract_strided_slice %5 {offsets = [0, 2], sizes = [12, 1], strides = [1, 1]} : vector<12x9xf32> to vector<12x1xf32>
    %16 = vector.broadcast %15 : vector<12x1xf32> to vector<12x128xf32>
    %17 = arith.mulf %14, %16 : vector<12x128xf32>
    %c0_10 = arith.constant 0 : index
    %c127 = arith.constant 127 : index
    %18 = vector.load %arg15[%c0_10, %c127] : memref<32x384xf32, #tpu.memory_space<vmem>>, vector<12x128xf32>
    %19 = vector.extract_strided_slice %5 {offsets = [0, 3], sizes = [12, 1], strides = [1, 1]} : vector<12x9xf32> to vector<12x1xf32>
    %20 = vector.broadcast %19 : vector<12x1xf32> to vector<12x128xf32>
    %21 = arith.mulf %18, %20 : vector<12x128xf32>
    %c0_11 = arith.constant 0 : index
    %c128_12 = arith.constant 128 : index
    %22 = vector.load %arg15[%c0_11, %c128_12] : memref<32x384xf32, #tpu.memory_space<vmem>>, vector<12x128xf32>
    %23 = vector.extract_strided_slice %5 {offsets = [0, 4], sizes = [12, 1], strides = [1, 1]} : vector<12x9xf32> to vector<12x1xf32>
    %24 = vector.broadcast %23 : vector<12x1xf32> to vector<12x128xf32>
    %25 = arith.mulf %22, %24 : vector<12x128xf32>
    %26 = arith.addf %9, %25 : vector<12x128xf32>
    %c0_13 = arith.constant 0 : index
    %c129 = arith.constant 129 : index
    %27 = vector.load %arg15[%c0_13, %c129] : memref<32x384xf32, #tpu.memory_space<vmem>>, vector<12x128xf32>
    %28 = vector.extract_strided_slice %5 {offsets = [0, 5], sizes = [12, 1], strides = [1, 1]} : vector<12x9xf32> to vector<12x1xf32>
    %29 = vector.broadcast %28 : vector<12x1xf32> to vector<12x128xf32>
    %30 = arith.mulf %27, %29 : vector<12x128xf32>
    %31 = arith.addf %13, %30 : vector<12x128xf32>
    %c0_14 = arith.constant 0 : index
    %c130 = arith.constant 130 : index
    %32 = vector.load %arg15[%c0_14, %c130] : memref<32x384xf32, #tpu.memory_space<vmem>>, vector<12x128xf32>
    %33 = vector.extract_strided_slice %5 {offsets = [0, 6], sizes = [12, 1], strides = [1, 1]} : vector<12x9xf32> to vector<12x1xf32>
    %34 = vector.broadcast %33 : vector<12x1xf32> to vector<12x128xf32>
    %35 = arith.mulf %32, %34 : vector<12x128xf32>
    %36 = arith.addf %17, %35 : vector<12x128xf32>
    %c0_15 = arith.constant 0 : index
    %c131 = arith.constant 131 : index
    %37 = vector.load %arg15[%c0_15, %c131] : memref<32x384xf32, #tpu.memory_space<vmem>>, vector<12x128xf32>
    %38 = vector.extract_strided_slice %5 {offsets = [0, 7], sizes = [12, 1], strides = [1, 1]} : vector<12x9xf32> to vector<12x1xf32>
    %39 = vector.broadcast %38 : vector<12x1xf32> to vector<12x128xf32>
    %40 = arith.mulf %37, %39 : vector<12x128xf32>
    %41 = arith.addf %21, %40 : vector<12x128xf32>
    %c0_16 = arith.constant 0 : index
    %c132 = arith.constant 132 : index
    %42 = vector.load %arg15[%c0_16, %c132] : memref<32x384xf32, #tpu.memory_space<vmem>>, vector<12x128xf32>
    %43 = vector.extract_strided_slice %5 {offsets = [0, 8], sizes = [12, 1], strides = [1, 1]} : vector<12x9xf32> to vector<12x1xf32>
    %44 = vector.broadcast %43 : vector<12x1xf32> to vector<12x128xf32>
    %45 = arith.mulf %42, %44 : vector<12x128xf32>
    %46 = arith.addf %26, %45 : vector<12x128xf32>
    %47 = arith.addf %46, %31 : vector<12x128xf32>
    %48 = arith.addf %47, %36 : vector<12x128xf32>
    %49 = arith.addf %48, %41 : vector<12x128xf32>
    %c0_17 = arith.constant 0 : index
    %c0_18 = arith.constant 0 : index
    %50 = vector.load %arg3[%c0_17, %c0_18] : memref<12x1xf32, #tpu.memory_space<vmem>>, vector<12x1xf32>
    %51 = vector.broadcast %50 : vector<12x1xf32> to vector<12x128xf32>
    %52 = arith.addf %49, %51 : vector<12x128xf32>
    %c0_19 = arith.constant 0 : index
    %c0_20 = arith.constant 0 : index
    %53 = vector.load %arg4[%c0_19, %c0_20] : memref<32x12xf32, #tpu.memory_space<vmem>>, vector<32x12xf32>
    %cst_21 = arith.constant dense<0.000000e+00> : vector<32x128xf32>
    %54 = tpu.matmul %53, %52, %cst_21 {dimension_numbers = #tpu.dot_dimension_numbers<[1], [0], [0], [1], [0, 0, 1, 1], [], []>} : vector<32x12xf32>, vector<12x128xf32>, vector<32x128xf32> -> vector<32x128xf32>
    %c0_22 = arith.constant 0 : index
    %c0_23 = arith.constant 0 : index
    %55 = vector.load %arg5[%c0_22, %c0_23] : memref<32x1xf32, #tpu.memory_space<vmem>>, vector<32x1xf32>
    %56 = vector.broadcast %55 : vector<32x1xf32> to vector<32x128xf32>
    %57 = arith.addf %54, %56 : vector<32x128xf32>
    %cst_24 = arith.constant dense<0.000000e+00> : vector<32xf32>
    %58 = vector.multi_reduction <add>, %57, %cst_24 [1] : vector<32x128xf32> to vector<32xf32>
    %59 = vector.shape_cast %58 : vector<32xf32> to vector<32x1xf32>
    %cst_25 = arith.constant 1.280000e+02 : f32
    %60 = vector.broadcast %cst_25 : f32 to vector<32x1xf32>
    %61 = arith.divf %59, %60 : vector<32x1xf32>
    %cst_26 = arith.constant 1.500000e-02 : f32
    %62 = vector.broadcast %cst_26 : f32 to vector<32x1xf32>
    %63 = arith.mulf %62, %61 : vector<32x1xf32>
    %64 = vector.broadcast %63 : vector<32x1xf32> to vector<32x128xf32>
    %65 = arith.subf %57, %64 : vector<32x128xf32>
    %66 = arith.mulf %65, %65 : vector<32x128xf32>
    %cst_27 = arith.constant dense<0.000000e+00> : vector<32xf32>
    %67 = vector.multi_reduction <add>, %66, %cst_27 [1] : vector<32x128xf32> to vector<32xf32>
    %68 = vector.shape_cast %67 : vector<32xf32> to vector<32x1xf32>
    %cst_28 = arith.constant 1.280000e+02 : f32
    %69 = vector.broadcast %cst_28 : f32 to vector<32x1xf32>
    %70 = arith.divf %68, %69 : vector<32x1xf32>
    %cst_29 = arith.constant 1.500000e-02 : f32
    %71 = vector.broadcast %cst_29 : f32 to vector<32x1xf32>
    %72 = arith.mulf %71, %70 : vector<32x1xf32>
    %cst_30 = arith.constant 9.850000e-01 : f32
    %73 = vector.broadcast %cst_30 : f32 to vector<32x1xf32>
    %74 = arith.addf %73, %72 : vector<32x1xf32>
    %75 = math.rsqrt %74 : vector<32x1xf32>
    %76 = vector.broadcast %75 : vector<32x1xf32> to vector<32x128xf32>
    %77 = arith.mulf %65, %76 : vector<32x128xf32>
    %c0_31 = arith.constant 0 : index
    %c0_32 = arith.constant 0 : index
    %78 = vector.load %arg10[%c0_31, %c0_32] : memref<32x1xf32, #tpu.memory_space<vmem>>, vector<32x1xf32>
    %79 = math.absf %78 : vector<32x1xf32>
    %80 = vector.broadcast %79 : vector<32x1xf32> to vector<32x128xf32>
    %81 = arith.mulf %77, %80 : vector<32x128xf32>
    %c0_33 = arith.constant 0 : index
    %c0_34 = arith.constant 0 : index
    %82 = vector.load %arg11[%c0_33, %c0_34] : memref<32x1xf32, #tpu.memory_space<vmem>>, vector<32x1xf32>
    %83 = vector.broadcast %82 : vector<32x1xf32> to vector<32x128xf32>
    %84 = arith.addf %81, %83 : vector<32x128xf32>
    %cst_35 = arith.constant 0.000000e+00 : f32
    %85 = vector.broadcast %cst_35 : f32 to vector<32x128xf32>
    %86 = arith.minimumf %84, %85 : vector<32x128xf32>
    %87 = math.exp %86 : vector<32x128xf32>
    %cst_36 = arith.constant 1.000000e+00 : f32
    %88 = vector.broadcast %cst_36 : f32 to vector<32x128xf32>
    %89 = arith.subf %87, %88 : vector<32x128xf32>
    %cst_37 = arith.constant 1.67326319 : f32
    %90 = vector.broadcast %cst_37 : f32 to vector<32x128xf32>
    %91 = arith.mulf %90, %89 : vector<32x128xf32>
    %cst_38 = arith.constant 0.000000e+00 : f32
    %92 = vector.broadcast %cst_38 : f32 to vector<32x128xf32>
    %93 = arith.cmpf ogt, %84, %92 : vector<32x128xf32>
    %94 = arith.select %93, %84, %91 : vector<32x128xi1>, vector<32x128xf32>
    %cst_39 = arith.constant 1.05070102 : f32
    %95 = vector.broadcast %cst_39 : f32 to vector<32x128xf32>
    %96 = arith.mulf %95, %94 : vector<32x128xf32>
    %cst_40 = arith.constant 0.000000e+00 : f32
    %97 = vector.broadcast %cst_40 : f32 to vector<32x384xf32>
    %c0_41 = arith.constant 0 : index
    %c0_42 = arith.constant 0 : index
    %98 = vector.load %arg15[%c0_41, %c0_42] : memref<32x384xf32, #tpu.memory_space<vmem>>, vector<32x384xf32>
    tpu.vector_store %arg15[%c0_41, %c0_42], %97 {strides = array<i32>} : memref<32x384xf32, #tpu.memory_space<vmem>>, vector<32x384xf32>,
    %c0_43 = arith.constant 0 : index
    %c128_44 = arith.constant 128 : index
    %99 = vector.load %arg15[%c0_43, %c128_44] : memref<32x384xf32, #tpu.memory_space<vmem>>, vector<32x128xf32>
    tpu.vector_store %arg15[%c0_43, %c128_44], %96 {strides = array<i32>} : memref<32x384xf32, #tpu.memory_space<vmem>>, vector<32x128xf32>,
    %c0_45 = arith.constant 0 : index
    %c0_46 = arith.constant 0 : index
    %100 = vector.load %arg6[%c0_45, %c0_46] : memref<32x9xf32, #tpu.memory_space<vmem>>, vector<32x9xf32>
    %c0_47 = arith.constant 0 : index
    %c124_48 = arith.constant 124 : index
    %101 = vector.load %arg15[%c0_47, %c124_48] : memref<32x384xf32, #tpu.memory_space<vmem>>, vector<32x128xf32>
    %102 = vector.extract_strided_slice %100 {offsets = [0, 0], sizes = [32, 1], strides = [1, 1]} : vector<32x9xf32> to vector<32x1xf32>
    %103 = vector.broadcast %102 : vector<32x1xf32> to vector<32x128xf32>
    %104 = arith.mulf %101, %103 : vector<32x128xf32>
    %c0_49 = arith.constant 0 : index
    %c125_50 = arith.constant 125 : index
    %105 = vector.load %arg15[%c0_49, %c125_50] : memref<32x384xf32, #tpu.memory_space<vmem>>, vector<32x128xf32>
    %106 = vector.extract_strided_slice %100 {offsets = [0, 1], sizes = [32, 1], strides = [1, 1]} : vector<32x9xf32> to vector<32x1xf32>
    %107 = vector.broadcast %106 : vector<32x1xf32> to vector<32x128xf32>
    %108 = arith.mulf %105, %107 : vector<32x128xf32>
    %c0_51 = arith.constant 0 : index
    %c126_52 = arith.constant 126 : index
    %109 = vector.load %arg15[%c0_51, %c126_52] : memref<32x384xf32, #tpu.memory_space<vmem>>, vector<32x128xf32>
    %110 = vector.extract_strided_slice %100 {offsets = [0, 2], sizes = [32, 1], strides = [1, 1]} : vector<32x9xf32> to vector<32x1xf32>
    %111 = vector.broadcast %110 : vector<32x1xf32> to vector<32x128xf32>
    %112 = arith.mulf %109, %111 : vector<32x128xf32>
    %c0_53 = arith.constant 0 : index
    %c127_54 = arith.constant 127 : index
    %113 = vector.load %arg15[%c0_53, %c127_54] : memref<32x384xf32, #tpu.memory_space<vmem>>, vector<32x128xf32>
    %114 = vector.extract_strided_slice %100 {offsets = [0, 3], sizes = [32, 1], strides = [1, 1]} : vector<32x9xf32> to vector<32x1xf32>
    %115 = vector.broadcast %114 : vector<32x1xf32> to vector<32x128xf32>
    %116 = arith.mulf %113, %115 : vector<32x128xf32>
    %c0_55 = arith.constant 0 : index
    %c128_56 = arith.constant 128 : index
    %117 = vector.load %arg15[%c0_55, %c128_56] : memref<32x384xf32, #tpu.memory_space<vmem>>, vector<32x128xf32>
    %118 = vector.extract_strided_slice %100 {offsets = [0, 4], sizes = [32, 1], strides = [1, 1]} : vector<32x9xf32> to vector<32x1xf32>
    %119 = vector.broadcast %118 : vector<32x1xf32> to vector<32x128xf32>
    %120 = arith.mulf %117, %119 : vector<32x128xf32>
    %121 = arith.addf %104, %120 : vector<32x128xf32>
    %c0_57 = arith.constant 0 : index
    %c129_58 = arith.constant 129 : index
    %122 = vector.load %arg15[%c0_57, %c129_58] : memref<32x384xf32, #tpu.memory_space<vmem>>, vector<32x128xf32>
    %123 = vector.extract_strided_slice %100 {offsets = [0, 5], sizes = [32, 1], strides = [1, 1]} : vector<32x9xf32> to vector<32x1xf32>
    %124 = vector.broadcast %123 : vector<32x1xf32> to vector<32x128xf32>
    %125 = arith.mulf %122, %124 : vector<32x128xf32>
    %126 = arith.addf %108, %125 : vector<32x128xf32>
    %c0_59 = arith.constant 0 : index
    %c130_60 = arith.constant 130 : index
    %127 = vector.load %arg15[%c0_59, %c130_60] : memref<32x384xf32, #tpu.memory_space<vmem>>, vector<32x128xf32>
    %128 = vector.extract_strided_slice %100 {offsets = [0, 6], sizes = [32, 1], strides = [1, 1]} : vector<32x9xf32> to vector<32x1xf32>
    %129 = vector.broadcast %128 : vector<32x1xf32> to vector<32x128xf32>
    %130 = arith.mulf %127, %129 : vector<32x128xf32>
    %131 = arith.addf %112, %130 : vector<32x128xf32>
    %c0_61 = arith.constant 0 : index
    %c131_62 = arith.constant 131 : index
    %132 = vector.load %arg15[%c0_61, %c131_62] : memref<32x384xf32, #tpu.memory_space<vmem>>, vector<32x128xf32>
    %133 = vector.extract_strided_slice %100 {offsets = [0, 7], sizes = [32, 1], strides = [1, 1]} : vector<32x9xf32> to vector<32x1xf32>
    %134 = vector.broadcast %133 : vector<32x1xf32> to vector<32x128xf32>
    %135 = arith.mulf %132, %134 : vector<32x128xf32>
    %136 = arith.addf %116, %135 : vector<32x128xf32>
    %c0_63 = arith.constant 0 : index
    %c132_64 = arith.constant 132 : index
    %137 = vector.load %arg15[%c0_63, %c132_64] : memref<32x384xf32, #tpu.memory_space<vmem>>, vector<32x128xf32>
    %138 = vector.extract_strided_slice %100 {offsets = [0, 8], sizes = [32, 1], strides = [1, 1]} : vector<32x9xf32> to vector<32x1xf32>
    %139 = vector.broadcast %138 : vector<32x1xf32> to vector<32x128xf32>
    %140 = arith.mulf %137, %139 : vector<32x128xf32>
    %141 = arith.addf %121, %140 : vector<32x128xf32>
    %142 = arith.addf %141, %126 : vector<32x128xf32>
    %143 = arith.addf %142, %131 : vector<32x128xf32>
    %144 = arith.addf %143, %136 : vector<32x128xf32>
    %c0_65 = arith.constant 0 : index
    %c0_66 = arith.constant 0 : index
    %145 = vector.load %arg7[%c0_65, %c0_66] : memref<32x1xf32, #tpu.memory_space<vmem>>, vector<32x1xf32>
    %146 = vector.broadcast %145 : vector<32x1xf32> to vector<32x128xf32>
    %147 = arith.addf %144, %146 : vector<32x128xf32>
    %c0_67 = arith.constant 0 : index
    %c0_68 = arith.constant 0 : index
    %148 = vector.load %arg8[%c0_67, %c0_68] : memref<8x32xf32, #tpu.memory_space<vmem>>, vector<8x32xf32>
    %cst_69 = arith.constant dense<0.000000e+00> : vector<8x128xf32>
    %149 = tpu.matmul %148, %147, %cst_69 {dimension_numbers = #tpu.dot_dimension_numbers<[1], [0], [0], [1], [0, 0, 1, 1], [], []>} : vector<8x32xf32>, vector<32x128xf32>, vector<8x128xf32> -> vector<8x128xf32>
    %c0_70 = arith.constant 0 : index
    %c0_71 = arith.constant 0 : index
    %150 = vector.load %arg9[%c0_70, %c0_71] : memref<8x1xf32, #tpu.memory_space<vmem>>, vector<8x1xf32>
    %151 = vector.broadcast %150 : vector<8x1xf32> to vector<8x128xf32>
    %152 = arith.addf %149, %151 : vector<8x128xf32>
    %cst_72 = arith.constant dense<0.000000e+00> : vector<8xf32>
    %153 = vector.multi_reduction <add>, %152, %cst_72 [1] : vector<8x128xf32> to vector<8xf32>
    %154 = vector.shape_cast %153 : vector<8xf32> to vector<8x1xf32>
    %cst_73 = arith.constant 1.280000e+02 : f32
    %155 = vector.broadcast %cst_73 : f32 to vector<8x1xf32>
    %156 = arith.divf %154, %155 : vector<8x1xf32>
    %cst_74 = arith.constant 1.500000e-02 : f32
    %157 = vector.broadcast %cst_74 : f32 to vector<8x1xf32>
    %158 = arith.mulf %157, %156 : vector<8x1xf32>
    %159 = vector.broadcast %158 : vector<8x1xf32> to vector<8x128xf32>
    %160 = arith.subf %152, %159 : vector<8x128xf32>
    %161 = arith.mulf %160, %160 : vector<8x128xf32>
    %cst_75 = arith.constant dense<0.000000e+00> : vector<8xf32>
    %162 = vector.multi_reduction <add>, %161, %cst_75 [1] : vector<8x128xf32> to vector<8xf32>
    %163 = vector.shape_cast %162 : vector<8xf32> to vector<8x1xf32>
    %cst_76 = arith.constant 1.280000e+02 : f32
    %164 = vector.broadcast %cst_76 : f32 to vector<8x1xf32>
    %165 = arith.divf %163, %164 : vector<8x1xf32>
    %cst_77 = arith.constant 1.500000e-02 : f32
    %166 = vector.broadcast %cst_77 : f32 to vector<8x1xf32>
    %167 = arith.mulf %166, %165 : vector<8x1xf32>
    %cst_78 = arith.constant 9.850000e-01 : f32
    %168 = vector.broadcast %cst_78 : f32 to vector<8x1xf32>
    %169 = arith.addf %168, %167 : vector<8x1xf32>
    %170 = math.rsqrt %169 : vector<8x1xf32>
    %171 = vector.broadcast %170 : vector<8x1xf32> to vector<8x128xf32>
    %172 = arith.mulf %160, %171 : vector<8x128xf32>
    %c0_79 = arith.constant 0 : index
    %c0_80 = arith.constant 0 : index
    %173 = vector.load %arg12[%c0_79, %c0_80] : memref<8x1xf32, #tpu.memory_space<vmem>>, vector<8x1xf32>
    %174 = math.absf %173 : vector<8x1xf32>
    %175 = vector.broadcast %174 : vector<8x1xf32> to vector<8x128xf32>
    %176 = arith.mulf %172, %175 : vector<8x128xf32>
    %c0_81 = arith.constant 0 : index
    %c0_82 = arith.constant 0 : index
    %177 = vector.load %arg13[%c0_81, %c0_82] : memref<8x1xf32, #tpu.memory_space<vmem>>, vector<8x1xf32>
    %178 = vector.broadcast %177 : vector<8x1xf32> to vector<8x128xf32>
    %179 = arith.addf %176, %178 : vector<8x128xf32>
    %cst_83 = arith.constant 0.000000e+00 : f32
    %180 = vector.broadcast %cst_83 : f32 to vector<8x128xf32>
    %181 = arith.minimumf %179, %180 : vector<8x128xf32>
    %182 = math.exp %181 : vector<8x128xf32>
    %cst_84 = arith.constant 1.000000e+00 : f32
    %183 = vector.broadcast %cst_84 : f32 to vector<8x128xf32>
    %184 = arith.subf %182, %183 : vector<8x128xf32>
    %cst_85 = arith.constant 1.67326319 : f32
    %185 = vector.broadcast %cst_85 : f32 to vector<8x128xf32>
    %186 = arith.mulf %185, %184 : vector<8x128xf32>
    %cst_86 = arith.constant 0.000000e+00 : f32
    %187 = vector.broadcast %cst_86 : f32 to vector<8x128xf32>
    %188 = arith.cmpf ogt, %179, %187 : vector<8x128xf32>
    %189 = arith.select %188, %179, %186 : vector<8x128xi1>, vector<8x128xf32>
    %cst_87 = arith.constant 1.05070102 : f32
    %190 = vector.broadcast %cst_87 : f32 to vector<8x128xf32>
    %191 = arith.mulf %190, %189 : vector<8x128xf32>
    %c0_88 = arith.constant 0 : index
    %c0_89 = arith.constant 0 : index
    %c0_90 = arith.constant 0 : index
    %192 = vector.load %arg14[%c0_88, %c0_89, %c0_90] : memref<1x20x128xf32, #tpu.memory_space<vmem>>, vector<1x8x128xf32>
    %193 = vector.shape_cast %192 : vector<1x8x128xf32> to vector<8x128xf32>
    %194 = vector.shape_cast %191 : vector<8x128xf32> to vector<1x8x128xf32>
    tpu.vector_store %arg14[%c0_88, %c0_89, %c0_90], %194 {strides = array<i32>} : memref<1x20x128xf32, #tpu.memory_space<vmem>>, vector<1x8x128xf32>,
    %c0_91 = arith.constant 0 : index
    %c8 = arith.constant 8 : index
    %c0_92 = arith.constant 0 : index
    %195 = vector.load %arg14[%c0_91, %c8, %c0_92] : memref<1x20x128xf32, #tpu.memory_space<vmem>>, vector<1x12x128xf32>
    %196 = vector.shape_cast %195 : vector<1x12x128xf32> to vector<12x128xf32>
    %197 = vector.shape_cast %1 : vector<12x128xf32> to vector<1x12x128xf32>
    tpu.vector_store %arg14[%c0_91, %c8, %c0_92], %197 {strides = array<i32>} : memref<1x20x128xf32, #tpu.memory_space<vmem>>, vector<1x12x128xf32>,
    return
  }
  func.func @transform_0(%arg0: i32) -> (i32, i32, i32) {
    %c0_i32 = arith.constant 0 : i32
    %c0_i32_0 = arith.constant 0 : i32
    %c0_i32_1 = arith.constant 0 : i32
    return %arg0, %c0_i32, %c0_i32_0 : i32, i32, i32
  }
  func.func @transform_1(%arg0: i32) -> (i32, i32) {
    %c0_i32 = arith.constant 0 : i32
    %c0_i32_0 = arith.constant 0 : i32
    %c0_i32_1 = arith.constant 0 : i32
    return %c0_i32, %c0_i32_0 : i32, i32
  }
  func.func @transform_2(%arg0: i32) -> (i32, i32) {
    %c0_i32 = arith.constant 0 : i32
    %c0_i32_0 = arith.constant 0 : i32
    %c0_i32_1 = arith.constant 0 : i32
    return %c0_i32, %c0_i32_0 : i32, i32
  }
  func.func @transform_3(%arg0: i32) -> (i32, i32) {
    %c0_i32 = arith.constant 0 : i32
    %c0_i32_0 = arith.constant 0 : i32
    %c0_i32_1 = arith.constant 0 : i32
    return %c0_i32, %c0_i32_0 : i32, i32
  }
  func.func @transform_4(%arg0: i32) -> (i32, i32) {
    %c0_i32 = arith.constant 0 : i32
    %c0_i32_0 = arith.constant 0 : i32
    %c0_i32_1 = arith.constant 0 : i32
    return %c0_i32, %c0_i32_0 : i32, i32
  }
  func.func @transform_5(%arg0: i32) -> (i32, i32) {
    %c0_i32 = arith.constant 0 : i32
    %c0_i32_0 = arith.constant 0 : i32
    %c0_i32_1 = arith.constant 0 : i32
    return %c0_i32, %c0_i32_0 : i32, i32
  }
  func.func @transform_6(%arg0: i32) -> (i32, i32) {
    %c0_i32 = arith.constant 0 : i32
    %c0_i32_0 = arith.constant 0 : i32
    %c0_i32_1 = arith.constant 0 : i32
    return %c0_i32, %c0_i32_0 : i32, i32
  }
  func.func @transform_7(%arg0: i32) -> (i32, i32) {
    %c0_i32 = arith.constant 0 : i32
    %c0_i32_0 = arith.constant 0 : i32
    %c0_i32_1 = arith.constant 0 : i32
    return %c0_i32, %c0_i32_0 : i32, i32
  }
  func.func @transform_8(%arg0: i32) -> (i32, i32) {
    %c0_i32 = arith.constant 0 : i32
    %c0_i32_0 = arith.constant 0 : i32
    %c0_i32_1 = arith.constant 0 : i32
    return %c0_i32, %c0_i32_0 : i32, i32
  }
  func.func @transform_9(%arg0: i32) -> (i32, i32) {
    %c0_i32 = arith.constant 0 : i32
    %c0_i32_0 = arith.constant 0 : i32
    %c0_i32_1 = arith.constant 0 : i32
    return %c0_i32, %c0_i32_0 : i32, i32
  }
  func.func @transform_10(%arg0: i32) -> (i32, i32) {
    %c0_i32 = arith.constant 0 : i32
    %c0_i32_0 = arith.constant 0 : i32
    %c0_i32_1 = arith.constant 0 : i32
    return %c0_i32, %c0_i32_0 : i32, i32
  }
  func.func @transform_11(%arg0: i32) -> (i32, i32) {
    %c0_i32 = arith.constant 0 : i32
    %c0_i32_0 = arith.constant 0 : i32
    %c0_i32_1 = arith.constant 0 : i32
    return %c0_i32, %c0_i32_0 : i32, i32
  }
  func.func @transform_12(%arg0: i32) -> (i32, i32) {
    %c0_i32 = arith.constant 0 : i32
    %c0_i32_0 = arith.constant 0 : i32
    %c0_i32_1 = arith.constant 0 : i32
    return %c0_i32, %c0_i32_0 : i32, i32
  }
  func.func @transform_13(%arg0: i32) -> (i32, i32, i32) {
    %c0_i32 = arith.constant 0 : i32
    %c0_i32_0 = arith.constant 0 : i32
    %c0_i32_1 = arith.constant 0 : i32
    return %arg0, %c0_i32, %c0_i32_0 : i32, i32, i32
  }
}

</mosaic_0001>

<llo_original>
// kernel: tpu_custom_call.1
$region0: #{tpu_custom_call.1}
  #allocation0 [shape = 'u32[]', space=smem, size = 0x4, offset = 0x4, fixed_abs, tag = 'smem constant byte address 0x4 - core index']
  #allocation1 [shape = 'u32[72,128]{1,0:T(1,128)}', space=vmem, size = 0x9000, scoped, tag = 'internal scratch']
  #allocation2 [shape = 'f32[32,384]{1,0:T(8,128)}', space=vmem, size = 0xc000, scoped, tag = 'scratch operand']
  %s0 = inlined_call_operand.vmem [shape: f32[8,12,128], index: 0, kind: input, shape index: {}]
  %s1 = inlined_call_operand.vmem [shape: f32[12,9], index: 1, kind: input, shape index: {}]
  %s2 = inlined_call_operand.vmem [shape: f32[12,1], index: 2, kind: input, shape index: {}]
  %s3 = inlined_call_operand.vmem [shape: f32[32,12], index: 3, kind: input, shape index: {}]
  %s4 = inlined_call_operand.vmem [shape: f32[32,1], index: 4, kind: input, shape index: {}]
  %s5 = inlined_call_operand.vmem [shape: f32[32,9], index: 5, kind: input, shape index: {}]
  %s6 = inlined_call_operand.vmem [shape: f32[32,1], index: 6, kind: input, shape index: {}]
  %s7 = inlined_call_operand.vmem [shape: f32[8,32], index: 7, kind: input, shape index: {}]
  %s8 = inlined_call_operand.vmem [shape: f32[8,1], index: 8, kind: input, shape index: {}]
  %s9 = inlined_call_operand.vmem [shape: f32[32,1], index: 9, kind: input, shape index: {}]
  %s10 = inlined_call_operand.vmem [shape: f32[32,1], index: 10, kind: input, shape index: {}]
  %s11 = inlined_call_operand.vmem [shape: f32[8,1], index: 11, kind: input, shape index: {}]
  %s12 = inlined_call_operand.vmem [shape: f32[8,1], index: 12, kind: input, shape index: {}]
  %s13 = inlined_call_operand.vmem [shape: f32[8,20,128], index: 13, kind: output, shape index: {}]
  %s14 = sld [smem:[#allocation0]]
  $region85: #{tpu_custom_call.1} parent=0
    _
  %s16 = ssub.s32 1, %s14
  %s17 = scalar_select 0, %s16, %s14
  loop: start=0, step=1, limit=10
  $region2: #{tpu_custom_call.1} parent=0 // loop_pre_header
    _
  $region3: #{tpu_custom_call.1} parent=0 // loop_header
    %s19 = sphi 0, %s23
    %p20 = scmp.ge.s32.totalorder %s19, 10
    %s29 = sphi 0, %s31
    %s32 = sphi 0, %s29
    %s33 = sphi 0, %s32
    %s49 = sphi 0, %s33
    %s53 = sphi 0, %s53
    %s55 = sphi 0, %s53
    %s56 = sphi 0, %s55
    %s70 = sphi 0, %s56
    %s74 = sphi 0, %s74
    %s76 = sphi 0, %s74
    %s77 = sphi 0, %s76
    %s91 = sphi 0, %s77
    %s95 = sphi 0, %s95
    %s97 = sphi 0, %s95
    %s98 = sphi 0, %s97
    %s112 = sphi 0, %s98
    %s116 = sphi 0, %s116
    %s118 = sphi 0, %s116
    %s119 = sphi 0, %s118
    %s133 = sphi 0, %s119
    %s137 = sphi 0, %s137
    %s139 = sphi 0, %s137
    %s140 = sphi 0, %s139
    %s154 = sphi 0, %s140
    %s158 = sphi 0, %s158
    %s160 = sphi 0, %s158
    %s161 = sphi 0, %s160
    %s175 = sphi 0, %s161
    %s179 = sphi 0, %s179
    %s181 = sphi 0, %s179
    %s182 = sphi 0, %s181
    %s196 = sphi 0, %s182
    %s200 = sphi 0, %s200
    %s202 = sphi 0, %s200
    %s203 = sphi 0, %s202
    %s217 = sphi 0, %s203
    %s221 = sphi 0, %s221
    %s223 = sphi 0, %s221
    %s224 = sphi 0, %s223
    %s238 = sphi 0, %s224
    %s242 = sphi 0, %s242
    %s244 = sphi 0, %s242
    %s245 = sphi 0, %s244
    %s259 = sphi 0, %s245
    %s263 = sphi 0, %s263
    %s265 = sphi 0, %s263
    %s266 = sphi 0, %s265
    %s280 = sphi 0, %s266
    %s284 = sphi 0, %s284
    %s286 = sphi 0, %s284
    %s287 = sphi 0, %s286
    %s301 = sphi 0, %s287
    %s307 = sphi 0, %s309
    %s310 = sphi 0, %s307
    %s311 = sphi 0, %s310
    %s327 = sphi 0, %s311
  $region4: #{tpu_custom_call.1} parent=0 // loop_header_branch
    %22 = sbr.rel (%p20) target = $region8
  $region5: #{tpu_custom_call.1} parent=0 // loop_body
    %s24 = ssub.s32 %s19, 1
    %s25 = ssub.s32 %s19, 2
    %s26 = sadd.s32 %s19, 1
    %s27 = ssub.s32 %s19, %s26
    %p28 = scmp.eq.s32.totalorder %s27, 0
    %s30 = sadd.s32 %s29, 1
    %s31 = scalar_select %p28, %s29, %s30
    %p34 = pneg %p28
    %p35 = scmp.eq.s32.totalorder %s19, 7
    %p36 = por %p34, %p35
    %p37 = scmp.ne.s32.totalorder %s29, %s32
    %p38 = scmp.eq.s32.totalorder %s19, 0
    %p39 = por %p37, %p38
    %p40 = scmp.ne.s32.totalorder %s29, %s32
    %p41 = scmp.eq.s32.totalorder %s24, 7
    %p42 = por %p40, %p41
    %p43 = scmp.ne.s32.totalorder %s32, %s33
    %p44 = scmp.eq.s32.totalorder %s24, 0
    %p45 = por %p43, %p44
    %p46 = scmp.ne.s32.totalorder %s32, %s33
    %p47 = scmp.eq.s32.totalorder %s25, 7
    %p48 = por %p46, %p47
    %p50 = scmp.ne.s32.totalorder %s33, %s49
    %p51 = scmp.eq.s32.totalorder %s25, 0
    %p52 = por %p50, %p51
    %s54 = sadd.s32 %s53, 1
    %p57 = scmp.eq.s32.totalorder %s19, 7
    %p58 = scmp.ne.s32.totalorder %s53, %s55
    %p59 = scmp.eq.s32.totalorder %s19, 0
    %p60 = por %p58, %p59
    %p61 = scmp.ne.s32.totalorder %s53, %s55
    %p62 = scmp.eq.s32.totalorder %s24, 7
    %p63 = por %p61, %p62
    %p64 = scmp.ne.s32.totalorder %s55, %s56
    %p65 = scmp.eq.s32.totalorder %s24, 0
    %p66 = por %p64, %p65
    %p67 = scmp.ne.s32.totalorder %s55, %s56
    %p68 = scmp.eq.s32.totalorder %s25, 7
    %p69 = por %p67, %p68
    %p71 = scmp.ne.s32.totalorder %s56, %s70
    %p72 = scmp.eq.s32.totalorder %s25, 0
    %p73 = por %p71, %p72
    %s75 = sadd.s32 %s74, 1
    %p78 = scmp.eq.s32.totalorder %s19, 7
    %p79 = scmp.ne.s32.totalorder %s74, %s76
    %p80 = scmp.eq.s32.totalorder %s19, 0
    %p81 = por %p79, %p80
    %p82 = scmp.ne.s32.totalorder %s74, %s76
    %p83 = scmp.eq.s32.totalorder %s24, 7
    %p84 = por %p82, %p83
    %p85 = scmp.ne.s32.totalorder %s76, %s77
    %p86 = scmp.eq.s32.totalorder %s24, 0
    %p87 = por %p85, %p86
    %p88 = scmp.ne.s32.totalorder %s76, %s77
    %p89 = scmp.eq.s32.totalorder %s25, 7
    %p90 = por %p88, %p89
    %p92 = scmp.ne.s32.totalorder %s77, %s91
    %p93 = scmp.eq.s32.totalorder %s25, 0
    %p94 = por %p92, %p93
    %s96 = sadd.s32 %s95, 1
    %p99 = scmp.eq.s32.totalorder %s19, 7
    %p100 = scmp.ne.s32.totalorder %s95, %s97
    %p101 = scmp.eq.s32.totalorder %s19, 0
    %p102 = por %p100, %p101
    %p103 = scmp.ne.s32.totalorder %s95, %s97
    %p104 = scmp.eq.s32.totalorder %s24, 7
    %p105 = por %p103, %p104
    %p106 = scmp.ne.s32.totalorder %s97, %s98
    %p107 = scmp.eq.s32.totalorder %s24, 0
    %p108 = por %p106, %p107
    %p109 = scmp.ne.s32.totalorder %s97, %s98
    %p110 = scmp.eq.s32.totalorder %s25, 7
    %p111 = por %p109, %p110
    %p113 = scmp.ne.s32.totalorder %s98, %s112
    %p114 = scmp.eq.s32.totalorder %s25, 0
    %p115 = por %p113, %p114
    %s117 = sadd.s32 %s116, 1
    %p120 = scmp.eq.s32.totalorder %s19, 7
    %p121 = scmp.ne.s32.totalorder %s116, %s118
    %p122 = scmp.eq.s32.totalorder %s19, 0
    %p123 = por %p121, %p122
    %p124 = scmp.ne.s32.totalorder %s116, %s118
    %p125 = scmp.eq.s32.totalorder %s24, 7
    %p126 = por %p124, %p125
    %p127 = scmp.ne.s32.totalorder %s118, %s119
    %p128 = scmp.eq.s32.totalorder %s24, 0
    %p129 = por %p127, %p128
    %p130 = scmp.ne.s32.totalorder %s118, %s119
    %p131 = scmp.eq.s32.totalorder %s25, 7
    %p132 = por %p130, %p131
    %p134 = scmp.ne.s32.totalorder %s119, %s133
    %p135 = scmp.eq.s32.totalorder %s25, 0
    %p136 = por %p134, %p135
    %s138 = sadd.s32 %s137, 1
    %p141 = scmp.eq.s32.totalorder %s19, 7
    %p142 = scmp.ne.s32.totalorder %s137, %s139
    %p143 = scmp.eq.s32.totalorder %s19, 0
    %p144 = por %p142, %p143
    %p145 = scmp.ne.s32.totalorder %s137, %s139
    %p146 = scmp.eq.s32.totalorder %s24, 7
    %p147 = por %p145, %p146
    %p148 = scmp.ne.s32.totalorder %s139, %s140
    %p149 = scmp.eq.s32.totalorder %s24, 0
    %p150 = por %p148, %p149
    %p151 = scmp.ne.s32.totalorder %s139, %s140
    %p152 = scmp.eq.s32.totalorder %s25, 7
    %p153 = por %p151, %p152
    %p155 = scmp.ne.s32.totalorder %s140, %s154
    %p156 = scmp.eq.s32.totalorder %s25, 0
    %p157 = por %p155, %p156
    %s159 = sadd.s32 %s158, 1
    %p162 = scmp.eq.s32.totalorder %s19, 7
    %p163 = scmp.ne.s32.totalorder %s158, %s160
    %p164 = scmp.eq.s32.totalorder %s19, 0
    %p165 = por %p163, %p164
    %p166 = scmp.ne.s32.totalorder %s158, %s160
    %p167 = scmp.eq.s32.totalorder %s24, 7
    %p168 = por %p166, %p167
    %p169 = scmp.ne.s32.totalorder %s160, %s161
    %p170 = scmp.eq.s32.totalorder %s24, 0
    %p171 = por %p169, %p170
    %p172 = scmp.ne.s32.totalorder %s160, %s161
    %p173 = scmp.eq.s32.totalorder %s25, 7
    %p174 = por %p172, %p173
    %p176 = scmp.ne.s32.totalorder %s161, %s175
    %p177 = scmp.eq.s32.totalorder %s25, 0
    %p178 = por %p176, %p177
    %s180 = sadd.s32 %s179, 1
    %p183 = scmp.eq.s32.totalorder %s19, 7
    %p184 = scmp.ne.s32.totalorder %s179, %s181
    %p185 = scmp.eq.s32.totalorder %s19, 0
    %p186 = por %p184, %p185
    %p187 = scmp.ne.s32.totalorder %s179, %s181
    %p188 = scmp.eq.s32.totalorder %s24, 7
    %p189 = por %p187, %p188
    %p190 = scmp.ne.s32.totalorder %s181, %s182
    %p191 = scmp.eq.s32.totalorder %s24, 0
    %p192 = por %p190, %p191
    %p193 = scmp.ne.s32.totalorder %s181, %s182
    %p194 = scmp.eq.s32.totalorder %s25, 7
    %p195 = por %p193, %p194
    %p197 = scmp.ne.s32.totalorder %s182, %s196
    %p198 = scmp.eq.s32.totalorder %s25, 0
    %p199 = por %p197, %p198
    %s201 = sadd.s32 %s200, 1
    %p204 = scmp.eq.s32.totalorder %s19, 7
    %p205 = scmp.ne.s32.totalorder %s200, %s202
    %p206 = scmp.eq.s32.totalorder %s19, 0
    %p207 = por %p205, %p206
    %p208 = scmp.ne.s32.totalorder %s200, %s202
    %p209 = scmp.eq.s32.totalorder %s24, 7
    %p210 = por %p208, %p209
    %p211 = scmp.ne.s32.totalorder %s202, %s203
    %p212 = scmp.eq.s32.totalorder %s24, 0
    %p213 = por %p211, %p212
    %p214 = scmp.ne.s32.totalorder %s202, %s203
    %p215 = scmp.eq.s32.totalorder %s25, 7
    %p216 = por %p214, %p215
    %p218 = scmp.ne.s32.totalorder %s203, %s217
    %p219 = scmp.eq.s32.totalorder %s25, 0
    %p220 = por %p218, %p219
    %s222 = sadd.s32 %s221, 1
    %p225 = scmp.eq.s32.totalorder %s19, 7
    %p226 = scmp.ne.s32.totalorder %s221, %s223
    %p227 = scmp.eq.s32.totalorder %s19, 0
    %p228 = por %p226, %p227
    %p229 = scmp.ne.s32.totalorder %s221, %s223
    %p230 = scmp.eq.s32.totalorder %s24, 7
    %p231 = por %p229, %p230
    %p232 = scmp.ne.s32.totalorder %s223, %s224
    %p233 = scmp.eq.s32.totalorder %s24, 0
    %p234 = por %p232, %p233
    %p235 = scmp.ne.s32.totalorder %s223, %s224
    %p236 = scmp.eq.s32.totalorder %s25, 7
    %p237 = por %p235, %p236
    %p239 = scmp.ne.s32.totalorder %s224, %s238
    %p240 = scmp.eq.s32.totalorder %s25, 0
    %p241 = por %p239, %p240
    %s243 = sadd.s32 %s242, 1
    %p246 = scmp.eq.s32.totalorder %s19, 7
    %p247 = scmp.ne.s32.totalorder %s242, %s244
    %p248 = scmp.eq.s32.totalorder %s19, 0
    %p249 = por %p247, %p248
    %p250 = scmp.ne.s32.totalorder %s242, %s244
    %p251 = scmp.eq.s32.totalorder %s24, 7
    %p252 = por %p250, %p251
    %p253 = scmp.ne.s32.totalorder %s244, %s245
    %p254 = scmp.eq.s32.totalorder %s24, 0
    %p255 = por %p253, %p254
    %p256 = scmp.ne.s32.totalorder %s244, %s245
    %p257 = scmp.eq.s32.totalorder %s25, 7
    %p258 = por %p256, %p257
    %p260 = scmp.ne.s32.totalorder %s245, %s259
    %p261 = scmp.eq.s32.totalorder %s25, 0
    %p262 = por %p260, %p261
    %s264 = sadd.s32 %s263, 1
    %p267 = scmp.eq.s32.totalorder %s19, 7
    %p268 = scmp.ne.s32.totalorder %s263, %s265
    %p269 = scmp.eq.s32.totalorder %s19, 0
    %p270 = por %p268, %p269
    %p271 = scmp.ne.s32.totalorder %s263, %s265
    %p272 = scmp.eq.s32.totalorder %s24, 7
    %p273 = por %p271, %p272
    %p274 = scmp.ne.s32.totalorder %s265, %s266
    %p275 = scmp.eq.s32.totalorder %s24, 0
    %p276 = por %p274, %p275
    %p277 = scmp.ne.s32.totalorder %s265, %s266
    %p278 = scmp.eq.s32.totalorder %s25, 7
    %p279 = por %p277, %p278
    %p281 = scmp.ne.s32.totalorder %s266, %s280
    %p282 = scmp.eq.s32.totalorder %s25, 0
    %p283 = por %p281, %p282
    %s285 = sadd.s32 %s284, 1
    %p288 = scmp.eq.s32.totalorder %s19, 7
    %p289 = scmp.ne.s32.totalorder %s284, %s286
    %p290 = scmp.eq.s32.totalorder %s19, 0
    %p291 = por %p289, %p290
    %p292 = scmp.ne.s32.totalorder %s284, %s286
    %p293 = scmp.eq.s32.totalorder %s24, 7
    %p294 = por %p292, %p293
    %p295 = scmp.ne.s32.totalorder %s286, %s287
    %p296 = scmp.eq.s32.totalorder %s24, 0
    %p297 = por %p295, %p296
    %p298 = scmp.ne.s32.totalorder %s286, %s287
    %p299 = scmp.eq.s32.totalorder %s25, 7
    %p300 = por %p298, %p299
    %p302 = scmp.ne.s32.totalorder %s287, %s301
    %p303 = scmp.eq.s32.totalorder %s25, 0
    %p304 = por %p302, %p303
    %s305 = ssub.s32 %s19, %s26
    %p306 = scmp.eq.s32.totalorder %s305, 0
    %s308 = sadd.s32 %s307, 1
    %s309 = scalar_select %p306, %s307, %s308
    %p312 = pneg %p306
    %p313 = scmp.eq.s32.totalorder %s19, 7
    %p314 = por %p312, %p313
    %p315 = scmp.ne.s32.totalorder %s307, %s310
    %p316 = scmp.eq.s32.totalorder %s19, 0
    %p317 = por %p315, %p316
    %p318 = scmp.ne.s32.totalorder %s307, %s310
    %p319 = scmp.eq.s32.totalorder %s24, 7
    %p320 = por %p318, %p319
    %p321 = scmp.ne.s32.totalorder %s310, %s311
    %p322 = scmp.eq.s32.totalorder %s24, 0
    %p323 = por %p321, %p322
    %p324 = scmp.ne.s32.totalorder %s310, %s311
    %p325 = scmp.eq.s32.totalorder %s25, 7
    %p326 = por %p324, %p325
    %p328 = scmp.ne.s32.totalorder %s311, %s327
    %p329 = scmp.eq.s32.totalorder %s25, 0
    %p330 = por %p328, %p329
    %p331 = scmp.le.s32.totalorder 1, %s19
    %p332 = scmp.lt.s32.totalorder %s19, 9
    %p333 = pnand %p331, %p332
    %p334 = pneg %p333
    // Predicated region
    $region9: #{tpu_custom_call.1} parent=5 // pred_check
      _
    $region10: #{tpu_custom_call.1} parent=5 // pred_check_branch
      %336 = sbr.rel (%p333) target = $region12
    $region11: #{tpu_custom_call.1} parent=5 // pred_region
      %s337 = ssub.s32 %s19, 1
      // Predicated region
      $region13: #{tpu_custom_call.1} parent=11 // pred_check
        %p338 = pneg %p66
      $region14: #{tpu_custom_call.1} parent=11 // pred_check_branch
        %340 = sbr.rel (%p338) target = $region16
      $region15: #{tpu_custom_call.1} parent=11 // pred_region
        _
      $region16: #{tpu_custom_call.1} parent=11 // pred_fallthru
        _
      // Predicated region
      $region17: #{tpu_custom_call.1} parent=11 // pred_check
        %p341 = pneg %p87
      $region18: #{tpu_custom_call.1} parent=11 // pred_check_branch
        %343 = sbr.rel (%p341) target = $region20
      $region19: #{tpu_custom_call.1} parent=11 // pred_region
        _
      $region20: #{tpu_custom_call.1} parent=11 // pred_fallthru
        _
      // Predicated region
      $region21: #{tpu_custom_call.1} parent=11 // pred_check
        %p344 = pneg %p108
      $region22: #{tpu_custom_call.1} parent=11 // pred_check_branch
        %346 = sbr.rel (%p344) target = $region24
      $region23: #{tpu_custom_call.1} parent=11 // pred_region
        _
      $region24: #{tpu_custom_call.1} parent=11 // pred_fallthru
        _
      // Predicated region
      $region25: #{tpu_custom_call.1} parent=11 // pred_check
        %p347 = pneg %p129
      $region26: #{tpu_custom_call.1} parent=11 // pred_check_branch
        %349 = sbr.rel (%p347) target = $region28
      $region27: #{tpu_custom_call.1} parent=11 // pred_region
        _
      $region28: #{tpu_custom_call.1} parent=11 // pred_fallthru
        _
      // Predicated region
      $region29: #{tpu_custom_call.1} parent=11 // pred_check
        %p350 = pneg %p150
      $region30: #{tpu_custom_call.1} parent=11 // pred_check_branch
        %352 = sbr.rel (%p350) target = $region32
      $region31: #{tpu_custom_call.1} parent=11 // pred_region
        _
      $region32: #{tpu_custom_call.1} parent=11 // pred_fallthru
        _
      // Predicated region
      $region33: #{tpu_custom_call.1} parent=11 // pred_check
        %p353 = pneg %p171
      $region34: #{tpu_custom_call.1} parent=11 // pred_check_branch
        %355 = sbr.rel (%p353) target = $region36
      $region35: #{tpu_custom_call.1} parent=11 // pred_region
        _
      $region36: #{tpu_custom_call.1} parent=11 // pred_fallthru
        _
      // Predicated region
      $region37: #{tpu_custom_call.1} parent=11 // pred_check
        %p356 = pneg %p192
      $region38: #{tpu_custom_call.1} parent=11 // pred_check_branch
        %358 = sbr.rel (%p356) target = $region40
      $region39: #{tpu_custom_call.1} parent=11 // pred_region
        _
      $region40: #{tpu_custom_call.1} parent=11 // pred_fallthru
        _
      // Predicated region
      $region41: #{tpu_custom_call.1} parent=11 // pred_check
        %p359 = pneg %p213
      $region42: #{tpu_custom_call.1} parent=11 // pred_check_branch
        %361 = sbr.rel (%p359) target = $region44
      $region43: #{tpu_custom_call.1} parent=11 // pred_region
        _
      $region44: #{tpu_custom_call.1} parent=11 // pred_fallthru
        _
      // Predicated region
      $region45: #{tpu_custom_call.1} parent=11 // pred_check
        %p362 = pneg %p234
      $region46: #{tpu_custom_call.1} parent=11 // pred_check_branch
        %364 = sbr.rel (%p362) target = $region48
      $region47: #{tpu_custom_call.1} parent=11 // pred_region
        _
      $region48: #{tpu_custom_call.1} parent=11 // pred_fallthru
        _
      // Predicated region
      $region49: #{tpu_custom_call.1} parent=11 // pred_check
        %p365 = pneg %p255
      $region50: #{tpu_custom_call.1} parent=11 // pred_check_branch
        %367 = sbr.rel (%p365) target = $region52
      $region51: #{tpu_custom_call.1} parent=11 // pred_region
        _
      $region52: #{tpu_custom_call.1} parent=11 // pred_fallthru
        _
      // Predicated region
      $region53: #{tpu_custom_call.1} parent=11 // pred_check
        %p368 = pneg %p276
      $region54: #{tpu_custom_call.1} parent=11 // pred_check_branch
        %370 = sbr.rel (%p368) target = $region56
      $region55: #{tpu_custom_call.1} parent=11 // pred_region
        _
      $region56: #{tpu_custom_call.1} parent=11 // pred_fallthru
        _
      // Predicated region
      $region57: #{tpu_custom_call.1} parent=11 // pred_check
        %p371 = pneg %p297
      $region58: #{tpu_custom_call.1} parent=11 // pred_check_branch
        %373 = sbr.rel (%p371) target = $region60
      $region59: #{tpu_custom_call.1} parent=11 // pred_region
        _
      $region60: #{tpu_custom_call.1} parent=11 // pred_fallthru
        _
    $region12: #{tpu_custom_call.1} parent=5 // pred_fallthru
      _
    %p374 = scmp.lt.s32.totalorder %s19, 8
    // Predicated region
    $region61: #{tpu_custom_call.1} parent=5 // pred_check
      %p375 = pneg %p374
    $region62: #{tpu_custom_call.1} parent=5 // pred_check_branch
      %377 = sbr.rel (%p375) target = $region64
    $region63: #{tpu_custom_call.1} parent=5 // pred_region
      // Predicated region
      $region65: #{tpu_custom_call.1} parent=63 // pred_check
        %p378 = pneg %p39
      $region66: #{tpu_custom_call.1} parent=63 // pred_check_branch
        %380 = sbr.rel (%p378) target = $region68
      $region67: #{tpu_custom_call.1} parent=63 // pred_region
        %p381 = scmp.lt.s32.totalorder %s19, 7
        %s382 = scalar_select %p381, %s19, 7
        %s383 = smul.addr %s382, 2
        %s384 = smul.addr %s383, 8
        %s385 = scalar_lea.vmem %s0, %s384
      $region68: #{tpu_custom_call.1} parent=63 // pred_fallthru
        _
    $region64: #{tpu_custom_call.1} parent=5 // pred_fallthru
      _
    %p386 = scmp.le.s32.totalorder 1, %s19
    %p387 = scmp.lt.s32.totalorder %s19, 9
    %p388 = pnand %p386, %p387
    %p389 = pneg %p388
    // Predicated region
    $region69: #{tpu_custom_call.1} parent=5 // pred_check
      _
    $region70: #{tpu_custom_call.1} parent=5 // pred_check_branch
      %391 = sbr.rel (%p388) target = $region72
    $region71: #{tpu_custom_call.1} parent=5 // pred_region
      %s392 = ssub.s32 %s19, 1
      %p393 = scmp.lt.s32.totalorder %s24, 7
      %s394 = scalar_select %p393, %s24, 7
      %s395 = smul.addr %s394, 2
      %s396 = smul.addr %s395, 8
      %s397 = scalar_lea.vmem %s0, %s396
      %p398 = pneg %p45
      %p399 = pneg %p42
      %p400 = pneg %p66
      %p401 = pneg %p63
      %p402 = pneg %p87
      %p403 = pneg %p84
      %p404 = pneg %p108
      %p405 = pneg %p105
      %p406 = pneg %p129
      %p407 = pneg %p126
      %p408 = pneg %p150
      %p409 = pneg %p147
      %p410 = pneg %p171
      %p411 = pneg %p168
      %p412 = pneg %p192
      %p413 = pneg %p189
      %p414 = pneg %p213
      %p415 = pneg %p210
      %p416 = pneg %p234
      %p417 = pneg %p231
      %p418 = pneg %p255
      %p419 = pneg %p252
      %p420 = pneg %p276
      %p421 = pneg %p273
      %p422 = pneg %p297
      %p423 = pneg %p294
      %p424 = pneg %p323
      %p425 = pneg %p320
      %p426 = scmp.lt.s32.totalorder %s24, 7
      %s427 = scalar_select %p426, %s24, 7
      %s428 = smul.addr %s427, 3
      %s429 = smul.addr %s428, 8
      %s430 = scalar_lea.vmem %s13, %s429
      %p431 = scmp.lt.s32.totalorder %s24, 7
      %s432 = scalar_select %p431, %s24, 7
      %s433 = smul.addr %s432, 2
      %s434 = smul.addr %s433, 8
      %s435 = scalar_lea.vmem %s0, %s434
      %p436 = scmp.lt.s32.totalorder %s24, 7
      %s437 = scalar_select %p436, %s24, 7
      %s438 = smul.addr %s437, 3
      %s439 = smul.addr %s438, 8
      %s440 = scalar_lea.vmem %s13, %s439
      %v441 = vld [vmem:[%s435] sm:$0xff]
      %v442 = vld [vmem:[%s435 + $0x8] sm:$0xf]
      %443 = vst [vmem:[#allocation2] sm:$0xff] 0.0
      %444 = vst [vmem:[#allocation2 + $0x8] sm:$0xff] 0.0
      %445 = vst [vmem:[#allocation2 + $0x10] sm:$0xff] 0.0
      %446 = vst [vmem:[#allocation2 + $0x18] sm:$0xff] 0.0
      %447 = vst [vmem:[#allocation2 + $0x20] sm:$0xff] 0.0
      %448 = vst [vmem:[#allocation2 + $0x28] sm:$0xff] 0.0
      %449 = vst [vmem:[#allocation2 + $0x30] sm:$0xff] 0.0
      %450 = vst [vmem:[#allocation2 + $0x38] sm:$0xff] 0.0
      %451 = vst [vmem:[#allocation2 + $0x40] sm:$0xff] 0.0
      %452 = vst [vmem:[#allocation2 + $0x48] sm:$0xff] 0.0
      %453 = vst [vmem:[#allocation2 + $0x50] sm:$0xff] 0.0
      %454 = vst [vmem:[#allocation2 + $0x58] sm:$0xff] 0.0
      %455 = vst [vmem:[#allocation2 + $0x8] sm:$0xff] %v441
      %456 = vst [vmem:[#allocation2 + $0x20] sm:$0xf] %v442
      %v457 = vld [vmem:[%s1] sm:$0xff]
      %v458 = vld [vmem:[%s1 + $0x8] sm:$0xf]
      %v459 = vld [vmem:[#allocation2] sm:$0xff]
      %v460 = vld [vmem:[#allocation2 + $0x8] sm:$0xff]
      %v461 = vld [vmem:[#allocation2 + $0x18] sm:$0xf]
      %v462 = vld [vmem:[#allocation2 + $0x20] sm:$0xf]
      %464 = vset.pattern.permute.xlu0 0
      %465 = vperm.xlu0 %464, %v457
      %v466 = vpop.permute.xlu0 %465
      %469 = vset.pattern.permute.xlu0 0
      %470 = vperm.xlu0 %469, %v458
      %v471 = vpop.permute.xlu0 %470
      %v473 = vmul.f32 %v459, %v466
      %v474 = vmul.f32 %v460, %v466
      %v475 = vmul.f32 %v461, %v471
      %v476 = vmul.f32 %v462, %v471
      %477 = vset.pattern.permute.xlu0 1
      %478 = vperm.xlu0 %477, %v457
      %v479 = vpop.permute.xlu0 %478
      %481 = vset.pattern.permute.xlu0 1
      %482 = vperm.xlu0 %481, %v458
      %v483 = vpop.permute.xlu0 %482
      %v485 = vmul.f32 %v459, %v479
      %v486 = vmul.f32 %v460, %v479
      %v487 = vmul.f32 %v461, %v483
      %v488 = vmul.f32 %v462, %v483
      %489 = vset.pattern.permute.xlu0 2
      %490 = vperm.xlu0 %489, %v457
      %v491 = vpop.permute.xlu0 %490
      %493 = vset.pattern.permute.xlu0 2
      %494 = vperm.xlu0 %493, %v458
      %v495 = vpop.permute.xlu0 %494
      %v497 = vmul.f32 %v459, %v491
      %v498 = vmul.f32 %v460, %v491
      %v499 = vmul.f32 %v461, %v495
      %v500 = vmul.f32 %v462, %v495
      %501 = vset.pattern.permute.xlu0 3
      %502 = vperm.xlu0 %501, %v457
      %v503 = vpop.permute.xlu0 %502
      %505 = vset.pattern.permute.xlu0 3
      %506 = vperm.xlu0 %505, %v458
      %v507 = vpop.permute.xlu0 %506
      %v509 = vmul.f32 %v459, %v503
      %v510 = vmul.f32 %v460, %v503
      %v511 = vmul.f32 %v461, %v507
      %v512 = vmul.f32 %v462, %v507
      %513 = vset.pattern.permute.xlu0 4
      %514 = vperm.xlu0 %513, %v457
      %v515 = vpop.permute.xlu0 %514
      %517 = vset.pattern.permute.xlu0 4
      %518 = vperm.xlu0 %517, %v458
      %v519 = vpop.permute.xlu0 %518
      %v521 = vmul.f32 %v460, %v515
      %v522 = vmul.f32 %v462, %v519
      %525 = vrot.lane.b32.xlu0 %v521, 124
      %v526 = vpop.permute.xlu0 %525
      %527 = vrot.lane.b32.xlu0 %v522, 124
      %v528 = vpop.permute.xlu0 %527
      %v531 = vadd.f32 %v473, %v526
      %v532 = vadd.f32 %v474, %v526
      %v533 = vadd.f32 %v475, %v528
      %v534 = vadd.f32 %v476, %v528
      %v535 = vld [vmem:[#allocation2 + $0x8] sm:$0xff]
      %v536 = vld [vmem:[#allocation2 + $0x10] sm:$0xff]
      %v537 = vld [vmem:[#allocation2 + $0x20] sm:$0xf]
      %v538 = vld [vmem:[#allocation2 + $0x28] sm:$0xf]
      %539 = vset.pattern.permute.xlu0 5
      %540 = vperm.xlu0 %539, %v457
      %v541 = vpop.permute.xlu0 %540
      %543 = vset.pattern.permute.xlu0 5
      %544 = vperm.xlu0 %543, %v458
      %v545 = vpop.permute.xlu0 %544
      %v547 = vmul.f32 %v535, %v541
      %v548 = vmul.f32 %v536, %v541
      %v549 = vmul.f32 %v537, %v545
      %v550 = vmul.f32 %v538, %v545
      %555 = vrot.lane.b32.xlu0 %v547, 124
      %v556 = vpop.permute.xlu0 %555
      %557 = vrot.lane.b32.xlu0 %v548, 124
      %v558 = vpop.permute.xlu0 %557
      %559 = vrot.lane.b32.xlu0 %v549, 124
      %v560 = vpop.permute.xlu0 %559
      %561 = vrot.lane.b32.xlu0 %v550, 124
      %v562 = vpop.permute.xlu0 %561
      %vm563 = vcmask 1014784
      %v564 = vsel %vm563, %v556, %v558
      %v565 = vsel %vm563, %v560, %v562
      %v570 = vadd.f32 %v485, %v556
      %v571 = vadd.f32 %v486, %v564
      %v572 = vadd.f32 %v487, %v560
      %v573 = vadd.f32 %v488, %v565
      %574 = vset.pattern.permute.xlu0 6
      %575 = vperm.xlu0 %574, %v457
      %v576 = vpop.permute.xlu0 %575
      %578 = vset.pattern.permute.xlu0 6
      %579 = vperm.xlu0 %578, %v458
      %v580 = vpop.permute.xlu0 %579
      %v582 = vmul.f32 %v535, %v576
      %v583 = vmul.f32 %v536, %v576
      %v584 = vmul.f32 %v537, %v580
      %v585 = vmul.f32 %v538, %v580
      %590 = vrot.lane.b32.xlu0 %v582, 124
      %v591 = vpop.permute.xlu0 %590
      %592 = vrot.lane.b32.xlu0 %v583, 124
      %v593 = vpop.permute.xlu0 %592
      %594 = vrot.lane.b32.xlu0 %v584, 124
      %v595 = vpop.permute.xlu0 %594
      %596 = vrot.lane.b32.xlu0 %v585, 124
      %v597 = vpop.permute.xlu0 %596
      %v598 = vsel %vm563, %v591, %v593
      %v599 = vsel %vm563, %v595, %v597
      %v604 = vadd.f32 %v497, %v591
      %v605 = vadd.f32 %v498, %v598
      %v606 = vadd.f32 %v499, %v595
      %v607 = vadd.f32 %v500, %v599
      %608 = vset.pattern.permute.xlu0 7
      %609 = vperm.xlu0 %608, %v457
      %v610 = vpop.permute.xlu0 %609
      %612 = vset.pattern.permute.xlu0 7
      %613 = vperm.xlu0 %612, %v458
      %v614 = vpop.permute.xlu0 %613
      %v616 = vmul.f32 %v535, %v610
      %v617 = vmul.f32 %v536, %v610
      %v618 = vmul.f32 %v537, %v614
      %v619 = vmul.f32 %v538, %v614
      %624 = vrot.lane.b32.xlu0 %v616, 124
      %v625 = vpop.permute.xlu0 %624
      %626 = vrot.lane.b32.xlu0 %v617, 124
      %v627 = vpop.permute.xlu0 %626
      %628 = vrot.lane.b32.xlu0 %v618, 124
      %v629 = vpop.permute.xlu0 %628
      %630 = vrot.lane.b32.xlu0 %v619, 124
      %v631 = vpop.permute.xlu0 %630
      %v632 = vsel %vm563, %v625, %v627
      %v633 = vsel %vm563, %v629, %v631
      %v638 = vadd.f32 %v509, %v625
      %v639 = vadd.f32 %v510, %v632
      %v640 = vadd.f32 %v511, %v629
      %v641 = vadd.f32 %v512, %v633
      %642 = vset.pattern.permute.xlu0 8
      %643 = vperm.xlu0 %642, %v457
      %v644 = vpop.permute.xlu0 %643
      %646 = vset.pattern.permute.xlu0 8
      %647 = vperm.xlu0 %646, %v458
      %v648 = vpop.permute.xlu0 %647
      %v650 = vmul.f32 %v535, %v644
      %v651 = vmul.f32 %v536, %v644
      %v652 = vmul.f32 %v537, %v648
      %v653 = vmul.f32 %v538, %v648
      %658 = vrot.lane.b32.xlu0 %v650, 120
      %v659 = vpop.permute.xlu0 %658
      %660 = vrot.lane.b32.xlu0 %v651, 120
      %v661 = vpop.permute.xlu0 %660
      %662 = vrot.lane.b32.xlu0 %v652, 120
      %v663 = vpop.permute.xlu0 %662
      %664 = vrot.lane.b32.xlu0 %v653, 120
      %v665 = vpop.permute.xlu0 %664
      %vm666 = vcmask 982016
      %v667 = vsel %vm666, %v659, %v661
      %v668 = vsel %vm666, %v663, %v665
      %v673 = vadd.f32 %v531, %v659
      %v674 = vadd.f32 %v532, %v667
      %v675 = vadd.f32 %v533, %v663
      %v676 = vadd.f32 %v534, %v668
      %681 = vrot.lane.b32.xlu0 %v570, 127
      %v682 = vpop.permute.xlu0 %681
      %683 = vrot.lane.b32.xlu0 %v571, 127
      %v684 = vpop.permute.xlu0 %683
      %685 = vrot.lane.b32.xlu0 %v572, 127
      %v686 = vpop.permute.xlu0 %685
      %687 = vrot.lane.b32.xlu0 %v573, 127
      %v688 = vpop.permute.xlu0 %687
      %vm689 = vcmask 1039360
      %v690 = vsel %vm689, %v682, %v684
      %v691 = vsel %vm689, %v686, %v688
      %v696 = vadd.f32 %v673, %v690
      %v697 = vadd.f32 %v674, %v684
      %v698 = vadd.f32 %v675, %v691
      %v699 = vadd.f32 %v676, %v688
      %704 = vrot.lane.b32.xlu0 %v604, 126
      %v705 = vpop.permute.xlu0 %704
      %706 = vrot.lane.b32.xlu0 %v605, 126
      %v707 = vpop.permute.xlu0 %706
      %708 = vrot.lane.b32.xlu0 %v606, 126
      %v709 = vpop.permute.xlu0 %708
      %710 = vrot.lane.b32.xlu0 %v607, 126
      %v711 = vpop.permute.xlu0 %710
      %vm712 = vcmask 1031168
      %v713 = vsel %vm712, %v705, %v707
      %v714 = vsel %vm712, %v709, %v711
      %v719 = vadd.f32 %v696, %v713
      %v720 = vadd.f32 %v697, %v707
      %v721 = vadd.f32 %v698, %v714
      %v722 = vadd.f32 %v699, %v711
      %727 = vrot.lane.b32.xlu0 %v638, 125
      %v728 = vpop.permute.xlu0 %727
      %729 = vrot.lane.b32.xlu0 %v639, 125
      %v730 = vpop.permute.xlu0 %729
      %731 = vrot.lane.b32.xlu0 %v640, 125
      %v732 = vpop.permute.xlu0 %731
      %733 = vrot.lane.b32.xlu0 %v641, 125
      %v734 = vpop.permute.xlu0 %733
      %vm735 = vcmask 1022976
      %v736 = vsel %vm735, %v728, %v730
      %v737 = vsel %vm735, %v732, %v734
      %v742 = vadd.f32 %v719, %v736
      %v743 = vadd.f32 %v720, %v730
      %v744 = vadd.f32 %v721, %v737
      %v745 = vadd.f32 %v722, %v734
      %v746 = vld [vmem:[%s2] sm:$0xff]
      %v747 = vld [vmem:[%s2 + $0x8] sm:$0xf]
      %749 = vset.pattern.permute.xlu0 0
      %750 = vperm.xlu0 %749, %v746
      %v751 = vpop.permute.xlu0 %750
      %754 = vset.pattern.permute.xlu0 0
      %755 = vperm.xlu0 %754, %v747
      %v756 = vpop.permute.xlu0 %755
      %v758 = vadd.f32 %v742, %v751
      %v759 = vadd.f32 %v743, %v751
      %v760 = vadd.f32 %v744, %v756
      %v761 = vadd.f32 %v745, %v756
      %v762 = vld [vmem:[%s3] sm:$0xff]
      %v763 = vld [vmem:[%s3 + $0x8] sm:$0xff]
      %v764 = vld [vmem:[%s3 + $0x10] sm:$0xff]
      %v765 = vld [vmem:[%s3 + $0x18] sm:$0xff]
      %v766 = vld [vmem:[%s4] sm:$0xff]
      %v767 = vld [vmem:[%s4 + $0x8] sm:$0xff]
      %v768 = vld [vmem:[%s4 + $0x10] sm:$0xff]
      %v769 = vld [vmem:[%s4 + $0x18] sm:$0xff]
      %771 = vset.pattern.permute.xlu0 0
      %772 = vperm.xlu0 %771, %v766
      %v773 = vpop.permute.xlu0 %772
      %776 = vset.pattern.permute.xlu0 0
      %777 = vperm.xlu0 %776, %v767
      %v778 = vpop.permute.xlu0 %777
      %781 = vset.pattern.permute.xlu0 0
      %782 = vperm.xlu0 %781, %v768
      %v783 = vpop.permute.xlu0 %782
      %786 = vset.pattern.permute.xlu0 0
      %787 = vperm.xlu0 %786, %v769
      %v788 = vpop.permute.xlu0 %787
      %794 = vrot.lane.b32.xlu0 %v758, 4
      %v795 = vpop.permute.xlu0 %794
      %796 = vrot.lane.b32.xlu0 %v759, 4
      %v797 = vpop.permute.xlu0 %796
      %798 = vrot.lane.b32.xlu0 %v760, 4
      %v799 = vpop.permute.xlu0 %798
      %800 = vrot.lane.b32.xlu0 %v761, 4
      %v801 = vpop.permute.xlu0 %800
      %vm802 = vcmask 31744
      %v803 = vsel %vm802, %v795, %v797
      %v804 = vsel %vm802, %v799, %v801
      %vm806 = vcmask 97280
      %v808 = vsel %vm806, %v762, 0
      %v811 = vsel %vm806, %v763, 0
      %v814 = vsel %vm806, %v764, 0
      %v817 = vsel %vm806, %v765, 0
      %vm819 = vcmask 1043456
      %v820 = vsel %vm819, %v804, 0
      %822 = vmatpush.msra.mxu0 0.0
      %823 = vmatpush.msra.mxu0 0.0
      %824 = vmatpush.msra.mxu0 0.0
      %825 = vmatpush.msra.mxu0 0.0
      %826 = vmatpush.msra.mxu0 0.0
      %827 = vmatpush.msra.mxu0 0.0
      %828 = vmatpush.msra.mxu0 0.0
      %829 = vmatpush.msra.mxu0 0.0
      %830 = vmatpush.msra.mxu0 0.0
      %831 = vmatpush.msra.mxu0 0.0
      %832 = vmatpush.msra.mxu0 0.0
      %833 = vmatpush.msra.mxu0 0.0
      %834 = vmatpush.msra.mxu0 0.0
      %835 = vmatpush.msra.mxu0 0.0
      %836 = vmatpush.msra.mxu0 %v820
      %837 = vmatpush.msra.mxu0 %v803
      %838 = vmatmul.f32.gmra.mxu0 %v808
      %v839 = vpop.f32.mrf.mxu0
      %v840 = vadd.f32 %v773, %v839
      %841 = vmatmul.f32.gmra.mxu0 %v811
      %v842 = vpop.f32.mrf.mxu0
      %v843 = vadd.f32 %v778, %v842
      %844 = vmatmul.f32.gmra.mxu0 %v814
      %v845 = vpop.f32.mrf.mxu0
      %v846 = vadd.f32 %v783, %v845
      %847 = vmatmul.f32.gmra.mxu0 %v817
      %v848 = vpop.f32.mrf.mxu0
      %v849 = vadd.f32 %v788, %v848
      %850 = vdwg.mxu0
      %851 = vadd.xlane.f32.xlu0 %v840
      %v852 = vpop.xlane.xlu0 %851
      %853 = vadd.xlane.f32.xlu0 %v843
      %v854 = vpop.xlane.xlu0 %853
      %855 = vadd.xlane.f32.xlu0 %v846
      %v856 = vpop.xlane.xlu0 %855
      %857 = vadd.xlane.f32.xlu0 %v849
      %v858 = vpop.xlane.xlu0 %857
      %v859 = vrcp.pop 128.0
      %v860 = vmul.f32 128.0, %v859
      %v861 = vsub.f32 1.0, %v860
      %v862 = vmul.f32 %v859, %v861
      %v863 = vadd.f32 %v859, %v862
      %vm864 = vweird.f32 %v859
      %v865 = vsel %vm864, %v859, %v863
      %v866 = vmul.f32 %v852, %v865
      %v867 = vmul.f32 %v854, %v865
      %v868 = vmul.f32 %v856, %v865
      %v869 = vmul.f32 %v858, %v865
      %v870 = vmul.f32 %v866, 0.015
      %v871 = vmul.f32 %v867, 0.015
      %v872 = vmul.f32 %v868, 0.015
      %v873 = vmul.f32 %v869, 0.015
      %v874 = vsub.f32 %v840, %v870
      %v875 = vsub.f32 %v843, %v871
      %v876 = vsub.f32 %v846, %v872
      %v877 = vsub.f32 %v849, %v873
      %v878 = vmul.f32 %v874, %v874
      %v879 = vmul.f32 %v875, %v875
      %v880 = vmul.f32 %v876, %v876
      %v881 = vmul.f32 %v877, %v877
      %882 = vadd.xlane.f32.xlu0 %v878
      %v883 = vpop.xlane.xlu0 %882
      %884 = vadd.xlane.f32.xlu0 %v879
      %v885 = vpop.xlane.xlu0 %884
      %886 = vadd.xlane.f32.xlu0 %v880
      %v887 = vpop.xlane.xlu0 %886
      %888 = vadd.xlane.f32.xlu0 %v881
      %v889 = vpop.xlane.xlu0 %888
      %v890 = vmul.f32 %v883, %v865
      %v891 = vmul.f32 %v885, %v865
      %v892 = vmul.f32 %v887, %v865
      %v893 = vmul.f32 %v889, %v865
      %v894 = vmul.f32 %v890, 0.015
      %v895 = vmul.f32 %v891, 0.015
      %v896 = vmul.f32 %v892, 0.015
      %v897 = vmul.f32 %v893, 0.015
      %v898 = vadd.f32 %v894, 0.985
      %v899 = vadd.f32 %v895, 0.985
      %v900 = vadd.f32 %v896, 0.985
      %v901 = vadd.f32 %v897, 0.985
      %v902 = vrsqrt.pop %v898
      %v903 = vmul.f32 %v902, %v898
      %v904 = vmul.f32 %v903, %v902
      %v905 = vmul.f32 0.5, %v904
      %v906 = vsub.f32 1.5, %v905
      %v907 = vmul.f32 %v902, %v906
      %vm908 = vweird.f32 %v898
      %vm909 = vweird.f32 %v902
      %vm910 = vmor %vm908, %vm909
      %v911 = vsel %vm910, %v902, %v907
      %v912 = vrsqrt.pop %v899
      %v913 = vmul.f32 %v912, %v899
      %v914 = vmul.f32 %v913, %v912
      %v915 = vmul.f32 0.5, %v914
      %v916 = vsub.f32 1.5, %v915
      %v917 = vmul.f32 %v912, %v916
      %vm918 = vweird.f32 %v899
      %vm919 = vweird.f32 %v912
      %vm920 = vmor %vm918, %vm919
      %v921 = vsel %vm920, %v912, %v917
      %v922 = vrsqrt.pop %v900
      %v923 = vmul.f32 %v922, %v900
      %v924 = vmul.f32 %v923, %v922
      %v925 = vmul.f32 0.5, %v924
      %v926 = vsub.f32 1.5, %v925
      %v927 = vmul.f32 %v922, %v926
      %vm928 = vweird.f32 %v900
      %vm929 = vweird.f32 %v922
      %vm930 = vmor %vm928, %vm929
      %v931 = vsel %vm930, %v922, %v927
      %v932 = vrsqrt.pop %v901
      %v933 = vmul.f32 %v932, %v901
      %v934 = vmul.f32 %v933, %v932
      %v935 = vmul.f32 0.5, %v934
      %v936 = vsub.f32 1.5, %v935
      %v937 = vmul.f32 %v932, %v936
      %vm938 = vweird.f32 %v901
      %vm939 = vweird.f32 %v932
      %vm940 = vmor %vm938, %vm939
      %v941 = vsel %vm940, %v932, %v937
      %v942 = vmul.f32 %v874, %v911
      %v943 = vmul.f32 %v875, %v921
      %v944 = vmul.f32 %v876, %v931
      %v945 = vmul.f32 %v877, %v941
      %v946 = vld [vmem:[%s9] sm:$0xff]
      %v947 = vld [vmem:[%s9 + $0x8] sm:$0xff]
      %v948 = vld [vmem:[%s9 + $0x10] sm:$0xff]
      %v949 = vld [vmem:[%s9 + $0x18] sm:$0xff]
      %v950 = vand.u32 2147483647, %v946
      %v951 = vand.u32 2147483647, %v947
      %v952 = vand.u32 2147483647, %v948
      %v953 = vand.u32 2147483647, %v949
      %955 = vset.pattern.permute.xlu0 0
      %956 = vperm.xlu0 %955, %v950
      %v957 = vpop.permute.xlu0 %956
      %960 = vset.pattern.permute.xlu0 0
      %961 = vperm.xlu0 %960, %v951
      %v962 = vpop.permute.xlu0 %961
      %965 = vset.pattern.permute.xlu0 0
      %966 = vperm.xlu0 %965, %v952
      %v967 = vpop.permute.xlu0 %966
      %970 = vset.pattern.permute.xlu0 0
      %971 = vperm.xlu0 %970, %v953
      %v972 = vpop.permute.xlu0 %971
      %v974 = vmul.f32 %v942, %v957
      %v975 = vmul.f32 %v943, %v962
      %v976 = vmul.f32 %v944, %v967
      %v977 = vmul.f32 %v945, %v972
      %v978 = vld [vmem:[%s10] sm:$0xff]
      %v979 = vld [vmem:[%s10 + $0x8] sm:$0xff]
      %v980 = vld [vmem:[%s10 + $0x10] sm:$0xff]
      %v981 = vld [vmem:[%s10 + $0x18] sm:$0xff]
      %983 = vset.pattern.permute.xlu0 0
      %984 = vperm.xlu0 %983, %v978
      %v985 = vpop.permute.xlu0 %984
      %988 = vset.pattern.permute.xlu0 0
      %989 = vperm.xlu0 %988, %v979
      %v990 = vpop.permute.xlu0 %989
      %993 = vset.pattern.permute.xlu0 0
      %994 = vperm.xlu0 %993, %v980
      %v995 = vpop.permute.xlu0 %994
      %998 = vset.pattern.permute.xlu0 0
      %999 = vperm.xlu0 %998, %v981
      %v1000 = vpop.permute.xlu0 %999
      %v1002 = vadd.f32 %v974, %v985
      %v1003 = vadd.f32 %v975, %v990
      %v1004 = vadd.f32 %v976, %v995
      %v1005 = vadd.f32 %v977, %v1000
      %v1006 = vmin.f32 %v1002, 0.0
      %v1007 = vmin.f32 %v1003, 0.0
      %v1008 = vmin.f32 %v1004, 0.0
      %v1009 = vmin.f32 %v1005, 0.0
      %v1010 = vmul.f32 %v1006, 1.442695
      %v1011 = vpow.pop %v1010
      %v1012 = vmul.f32 %v1007, 1.442695
      %v1013 = vpow.pop %v1012
      %v1014 = vmul.f32 %v1008, 1.442695
      %v1015 = vpow.pop %v1014
      %v1016 = vmul.f32 %v1009, 1.442695
      %v1017 = vpow.pop %v1016
      %v1018 = vsub.f32 %v1011, 1.0
      %v1019 = vsub.f32 %v1013, 1.0
      %v1020 = vsub.f32 %v1015, 1.0
      %v1021 = vsub.f32 %v1017, 1.0
      %v1022 = vmul.f32 %v1018, 1.6732632
      %v1023 = vmul.f32 %v1019, 1.6732632
      %v1024 = vmul.f32 %v1020, 1.6732632
      %v1025 = vmul.f32 %v1021, 1.6732632
      %vm1026 = vcmp.gt.f32.partialorder %v1002, 0.0
      %vm1027 = vcmp.gt.f32.partialorder %v1003, 0.0
      %vm1028 = vcmp.gt.f32.partialorder %v1004, 0.0
      %vm1029 = vcmp.gt.f32.partialorder %v1005, 0.0
      %v1030 = vsel %vm1026, %v1002, %v1022
      %v1031 = vsel %vm1027, %v1003, %v1023
      %v1032 = vsel %vm1028, %v1004, %v1024
      %v1033 = vsel %vm1029, %v1005, %v1025
      %v1034 = vmul.f32 %v1030, 1.050701
      %v1035 = vmul.f32 %v1031, 1.050701
      %v1036 = vmul.f32 %v1032, 1.050701
      %v1037 = vmul.f32 %v1033, 1.050701
      %1038 = vst [vmem:[#allocation2] sm:$0xff] 0.0
      %1039 = vst [vmem:[#allocation2 + $0x8] sm:$0xff] 0.0
      %1040 = vst [vmem:[#allocation2 + $0x10] sm:$0xff] 0.0
      %1041 = vst [vmem:[#allocation2 + $0x18] sm:$0xff] 0.0
      %1042 = vst [vmem:[#allocation2 + $0x20] sm:$0xff] 0.0
      %1043 = vst [vmem:[#allocation2 + $0x28] sm:$0xff] 0.0
      %1044 = vst [vmem:[#allocation2 + $0x30] sm:$0xff] 0.0
      %1045 = vst [vmem:[#allocation2 + $0x38] sm:$0xff] 0.0
      %1046 = vst [vmem:[#allocation2 + $0x40] sm:$0xff] 0.0
      %1047 = vst [vmem:[#allocation2 + $0x48] sm:$0xff] 0.0
      %1048 = vst [vmem:[#allocation2 + $0x50] sm:$0xff] 0.0
      %1049 = vst [vmem:[#allocation2 + $0x58] sm:$0xff] 0.0
      %1050 = vst [vmem:[#allocation2 + $0x8] sm:$0xff] %v1034
      %1051 = vst [vmem:[#allocation2 + $0x20] sm:$0xff] %v1035
      %1052 = vst [vmem:[#allocation2 + $0x38] sm:$0xff] %v1036
      %1053 = vst [vmem:[#allocation2 + $0x50] sm:$0xff] %v1037
      %v1054 = vld [vmem:[%s5] sm:$0xff]
      %v1055 = vld [vmem:[%s5 + $0x8] sm:$0xff]
      %v1056 = vld [vmem:[%s5 + $0x10] sm:$0xff]
      %v1057 = vld [vmem:[%s5 + $0x18] sm:$0xff]
      %v1058 = vld [vmem:[#allocation2] sm:$0xff]
      %v1059 = vld [vmem:[#allocation2 + $0x8] sm:$0xff]
      %v1060 = vld [vmem:[#allocation2 + $0x18] sm:$0xff]
      %v1061 = vld [vmem:[#allocation2 + $0x20] sm:$0xff]
      %v1062 = vld [vmem:[#allocation2 + $0x30] sm:$0xff]
      %v1063 = vld [vmem:[#allocation2 + $0x38] sm:$0xff]
      %v1064 = vld [vmem:[#allocation2 + $0x48] sm:$0xff]
      %v1065 = vld [vmem:[#allocation2 + $0x50] sm:$0xff]
      %1067 = vset.pattern.permute.xlu0 0
      %1068 = vperm.xlu0 %1067, %v1054
      %v1069 = vpop.permute.xlu0 %1068
      %1072 = vset.pattern.permute.xlu0 0
      %1073 = vperm.xlu0 %1072, %v1055
      %v1074 = vpop.permute.xlu0 %1073
      %1077 = vset.pattern.permute.xlu0 0
      %1078 = vperm.xlu0 %1077, %v1056
      %v1079 = vpop.permute.xlu0 %1078
      %1082 = vset.pattern.permute.xlu0 0
      %1083 = vperm.xlu0 %1082, %v1057
      %v1084 = vpop.permute.xlu0 %1083
      %v1086 = vmul.f32 %v1058, %v1069
      %v1087 = vmul.f32 %v1059, %v1069
      %v1088 = vmul.f32 %v1060, %v1074
      %v1089 = vmul.f32 %v1061, %v1074
      %v1090 = vmul.f32 %v1062, %v1079
      %v1091 = vmul.f32 %v1063, %v1079
      %v1092 = vmul.f32 %v1064, %v1084
      %v1093 = vmul.f32 %v1065, %v1084
      %1094 = vset.pattern.permute.xlu0 1
      %1095 = vperm.xlu0 %1094, %v1054
      %v1096 = vpop.permute.xlu0 %1095
      %1098 = vset.pattern.permute.xlu0 1
      %1099 = vperm.xlu0 %1098, %v1055
      %v1100 = vpop.permute.xlu0 %1099
      %1102 = vset.pattern.permute.xlu0 1
      %1103 = vperm.xlu0 %1102, %v1056
      %v1104 = vpop.permute.xlu0 %1103
      %1106 = vset.pattern.permute.xlu0 1
      %1107 = vperm.xlu0 %1106, %v1057
      %v1108 = vpop.permute.xlu0 %1107
      %v1110 = vmul.f32 %v1058, %v1096
      %v1111 = vmul.f32 %v1059, %v1096
      %v1112 = vmul.f32 %v1060, %v1100
      %v1113 = vmul.f32 %v1061, %v1100
      %v1114 = vmul.f32 %v1062, %v1104
      %v1115 = vmul.f32 %v1063, %v1104
      %v1116 = vmul.f32 %v1064, %v1108
      %v1117 = vmul.f32 %v1065, %v1108
      %1118 = vset.pattern.permute.xlu0 2
      %1119 = vperm.xlu0 %1118, %v1054
      %v1120 = vpop.permute.xlu0 %1119
      %1122 = vset.pattern.permute.xlu0 2
      %1123 = vperm.xlu0 %1122, %v1055
      %v1124 = vpop.permute.xlu0 %1123
      %1126 = vset.pattern.permute.xlu0 2
      %1127 = vperm.xlu0 %1126, %v1056
      %v1128 = vpop.permute.xlu0 %1127
      %1130 = vset.pattern.permute.xlu0 2
      %1131 = vperm.xlu0 %1130, %v1057
      %v1132 = vpop.permute.xlu0 %1131
      %v1134 = vmul.f32 %v1058, %v1120
      %v1135 = vmul.f32 %v1059, %v1120
      %v1136 = vmul.f32 %v1060, %v1124
      %v1137 = vmul.f32 %v1061, %v1124
      %v1138 = vmul.f32 %v1062, %v1128
      %v1139 = vmul.f32 %v1063, %v1128
      %v1140 = vmul.f32 %v1064, %v1132
      %v1141 = vmul.f32 %v1065, %v1132
      %1142 = vset.pattern.permute.xlu0 3
      %1143 = vperm.xlu0 %1142, %v1054
      %v1144 = vpop.permute.xlu0 %1143
      %1146 = vset.pattern.permute.xlu0 3
      %1147 = vperm.xlu0 %1146, %v1055
      %v1148 = vpop.permute.xlu0 %1147
      %1150 = vset.pattern.permute.xlu0 3
      %1151 = vperm.xlu0 %1150, %v1056
      %v1152 = vpop.permute.xlu0 %1151
      %1154 = vset.pattern.permute.xlu0 3
      %1155 = vperm.xlu0 %1154, %v1057
      %v1156 = vpop.permute.xlu0 %1155
      %v1158 = vmul.f32 %v1058, %v1144
      %v1159 = vmul.f32 %v1059, %v1144
      %v1160 = vmul.f32 %v1060, %v1148
      %v1161 = vmul.f32 %v1061, %v1148
      %v1162 = vmul.f32 %v1062, %v1152
      %v1163 = vmul.f32 %v1063, %v1152
      %v1164 = vmul.f32 %v1064, %v1156
      %v1165 = vmul.f32 %v1065, %v1156
      %1166 = vset.pattern.permute.xlu0 4
      %1167 = vperm.xlu0 %1166, %v1054
      %v1168 = vpop.permute.xlu0 %1167
      %1170 = vset.pattern.permute.xlu0 4
      %1171 = vperm.xlu0 %1170, %v1055
      %v1172 = vpop.permute.xlu0 %1171
      %1174 = vset.pattern.permute.xlu0 4
      %1175 = vperm.xlu0 %1174, %v1056
      %v1176 = vpop.permute.xlu0 %1175
      %1178 = vset.pattern.permute.xlu0 4
      %1179 = vperm.xlu0 %1178, %v1057
      %v1180 = vpop.permute.xlu0 %1179
      %v1182 = vmul.f32 %v1059, %v1168
      %v1183 = vmul.f32 %v1061, %v1172
      %v1184 = vmul.f32 %v1063, %v1176
      %v1185 = vmul.f32 %v1065, %v1180
      %1190 = vrot.lane.b32.xlu0 %v1182, 124
      %v1191 = vpop.permute.xlu0 %1190
      %1192 = vrot.lane.b32.xlu0 %v1183, 124
      %v1193 = vpop.permute.xlu0 %1192
      %1194 = vrot.lane.b32.xlu0 %v1184, 124
      %v1195 = vpop.permute.xlu0 %1194
      %1196 = vrot.lane.b32.xlu0 %v1185, 124
      %v1197 = vpop.permute.xlu0 %1196
      %v1202 = vadd.f32 %v1086, %v1191
      %v1203 = vadd.f32 %v1087, %v1191
      %v1204 = vadd.f32 %v1088, %v1193
      %v1205 = vadd.f32 %v1089, %v1193
      %v1206 = vadd.f32 %v1090, %v1195
      %v1207 = vadd.f32 %v1091, %v1195
      %v1208 = vadd.f32 %v1092, %v1197
      %v1209 = vadd.f32 %v1093, %v1197
      %v1210 = vld [vmem:[#allocation2 + $0x8] sm:$0xff]
      %v1211 = vld [vmem:[#allocation2 + $0x10] sm:$0xff]
      %v1212 = vld [vmem:[#allocation2 + $0x20] sm:$0xff]
      %v1213 = vld [vmem:[#allocation2 + $0x28] sm:$0xff]
      %v1214 = vld [vmem:[#allocation2 + $0x38] sm:$0xff]
      %v1215 = vld [vmem:[#allocation2 + $0x40] sm:$0xff]
      %v1216 = vld [vmem:[#allocation2 + $0x50] sm:$0xff]
      %v1217 = vld [vmem:[#allocation2 + $0x58] sm:$0xff]
      %1218 = vset.pattern.permute.xlu0 5
      %1219 = vperm.xlu0 %1218, %v1054
      %v1220 = vpop.permute.xlu0 %1219
      %1222 = vset.pattern.permute.xlu0 5
      %1223 = vperm.xlu0 %1222, %v1055
      %v1224 = vpop.permute.xlu0 %1223
      %1226 = vset.pattern.permute.xlu0 5
      %1227 = vperm.xlu0 %1226, %v1056
      %v1228 = vpop.permute.xlu0 %1227
      %1230 = vset.pattern.permute.xlu0 5
      %1231 = vperm.xlu0 %1230, %v1057
      %v1232 = vpop.permute.xlu0 %1231
      %v1234 = vmul.f32 %v1210, %v1220
      %v1235 = vmul.f32 %v1211, %v1220
      %v1236 = vmul.f32 %v1212, %v1224
      %v1237 = vmul.f32 %v1213, %v1224
      %v1238 = vmul.f32 %v1214, %v1228
      %v1239 = vmul.f32 %v1215, %v1228
      %v1240 = vmul.f32 %v1216, %v1232
      %v1241 = vmul.f32 %v1217, %v1232
      %1250 = vrot.lane.b32.xlu0 %v1234, 124
      %v1251 = vpop.permute.xlu0 %1250
      %1252 = vrot.lane.b32.xlu0 %v1235, 124
      %v1253 = vpop.permute.xlu0 %1252
      %1254 = vrot.lane.b32.xlu0 %v1236, 124
      %v1255 = vpop.permute.xlu0 %1254
      %1256 = vrot.lane.b32.xlu0 %v1237, 124
      %v1257 = vpop.permute.xlu0 %1256
      %1258 = vrot.lane.b32.xlu0 %v1238, 124
      %v1259 = vpop.permute.xlu0 %1258
      %1260 = vrot.lane.b32.xlu0 %v1239, 124
      %v1261 = vpop.permute.xlu0 %1260
      %1262 = vrot.lane.b32.xlu0 %v1240, 124
      %v1263 = vpop.permute.xlu0 %1262
      %1264 = vrot.lane.b32.xlu0 %v1241, 124
      %v1265 = vpop.permute.xlu0 %1264
      %v1266 = vsel %vm563, %v1251, %v1253
      %v1267 = vsel %vm563, %v1255, %v1257
      %v1268 = vsel %vm563, %v1259, %v1261
      %v1269 = vsel %vm563, %v1263, %v1265
      %v1278 = vadd.f32 %v1110, %v1251
      %v1279 = vadd.f32 %v1111, %v1266
      %v1280 = vadd.f32 %v1112, %v1255
      %v1281 = vadd.f32 %v1113, %v1267
      %v1282 = vadd.f32 %v1114, %v1259
      %v1283 = vadd.f32 %v1115, %v1268
      %v1284 = vadd.f32 %v1116, %v1263
      %v1285 = vadd.f32 %v1117, %v1269
      %1286 = vset.pattern.permute.xlu0 6
      %1287 = vperm.xlu0 %1286, %v1054
      %v1288 = vpop.permute.xlu0 %1287
      %1290 = vset.pattern.permute.xlu0 6
      %1291 = vperm.xlu0 %1290, %v1055
      %v1292 = vpop.permute.xlu0 %1291
      %1294 = vset.pattern.permute.xlu0 6
      %1295 = vperm.xlu0 %1294, %v1056
      %v1296 = vpop.permute.xlu0 %1295
      %1298 = vset.pattern.permute.xlu0 6
      %1299 = vperm.xlu0 %1298, %v1057
      %v1300 = vpop.permute.xlu0 %1299
      %v1302 = vmul.f32 %v1210, %v1288
      %v1303 = vmul.f32 %v1211, %v1288
      %v1304 = vmul.f32 %v1212, %v1292
      %v1305 = vmul.f32 %v1213, %v1292
      %v1306 = vmul.f32 %v1214, %v1296
      %v1307 = vmul.f32 %v1215, %v1296
      %v1308 = vmul.f32 %v1216, %v1300
      %v1309 = vmul.f32 %v1217, %v1300
      %1318 = vrot.lane.b32.xlu0 %v1302, 124
      %v1319 = vpop.permute.xlu0 %1318
      %1320 = vrot.lane.b32.xlu0 %v1303, 124
      %v1321 = vpop.permute.xlu0 %1320
      %1322 = vrot.lane.b32.xlu0 %v1304, 124
      %v1323 = vpop.permute.xlu0 %1322
      %1324 = vrot.lane.b32.xlu0 %v1305, 124
      %v1325 = vpop.permute.xlu0 %1324
      %1326 = vrot.lane.b32.xlu0 %v1306, 124
      %v1327 = vpop.permute.xlu0 %1326
      %1328 = vrot.lane.b32.xlu0 %v1307, 124
      %v1329 = vpop.permute.xlu0 %1328
      %1330 = vrot.lane.b32.xlu0 %v1308, 124
      %v1331 = vpop.permute.xlu0 %1330
      %1332 = vrot.lane.b32.xlu0 %v1309, 124
      %v1333 = vpop.permute.xlu0 %1332
      %v1334 = vsel %vm563, %v1319, %v1321
      %v1335 = vsel %vm563, %v1323, %v1325
      %v1336 = vsel %vm563, %v1327, %v1329
      %v1337 = vsel %vm563, %v1331, %v1333
      %v1346 = vadd.f32 %v1134, %v1319
      %v1347 = vadd.f32 %v1135, %v1334
      %v1348 = vadd.f32 %v1136, %v1323
      %v1349 = vadd.f32 %v1137, %v1335
      %v1350 = vadd.f32 %v1138, %v1327
      %v1351 = vadd.f32 %v1139, %v1336
      %v1352 = vadd.f32 %v1140, %v1331
      %v1353 = vadd.f32 %v1141, %v1337
      %1354 = vset.pattern.permute.xlu0 7
      %1355 = vperm.xlu0 %1354, %v1054
      %v1356 = vpop.permute.xlu0 %1355
      %1358 = vset.pattern.permute.xlu0 7
      %1359 = vperm.xlu0 %1358, %v1055
      %v1360 = vpop.permute.xlu0 %1359
      %1362 = vset.pattern.permute.xlu0 7
      %1363 = vperm.xlu0 %1362, %v1056
      %v1364 = vpop.permute.xlu0 %1363
      %1366 = vset.pattern.permute.xlu0 7
      %1367 = vperm.xlu0 %1366, %v1057
      %v1368 = vpop.permute.xlu0 %1367
      %v1370 = vmul.f32 %v1210, %v1356
      %v1371 = vmul.f32 %v1211, %v1356
      %v1372 = vmul.f32 %v1212, %v1360
      %v1373 = vmul.f32 %v1213, %v1360
      %v1374 = vmul.f32 %v1214, %v1364
      %v1375 = vmul.f32 %v1215, %v1364
      %v1376 = vmul.f32 %v1216, %v1368
      %v1377 = vmul.f32 %v1217, %v1368
      %1386 = vrot.lane.b32.xlu0 %v1370, 124
      %v1387 = vpop.permute.xlu0 %1386
      %1388 = vrot.lane.b32.xlu0 %v1371, 124
      %v1389 = vpop.permute.xlu0 %1388
      %1390 = vrot.lane.b32.xlu0 %v1372, 124
      %v1391 = vpop.permute.xlu0 %1390
      %1392 = vrot.lane.b32.xlu0 %v1373, 124
      %v1393 = vpop.permute.xlu0 %1392
      %1394 = vrot.lane.b32.xlu0 %v1374, 124
      %v1395 = vpop.permute.xlu0 %1394
      %1396 = vrot.lane.b32.xlu0 %v1375, 124
      %v1397 = vpop.permute.xlu0 %1396
      %1398 = vrot.lane.b32.xlu0 %v1376, 124
      %v1399 = vpop.permute.xlu0 %1398
      %1400 = vrot.lane.b32.xlu0 %v1377, 124
      %v1401 = vpop.permute.xlu0 %1400
      %v1402 = vsel %vm563, %v1387, %v1389
      %v1403 = vsel %vm563, %v1391, %v1393
      %v1404 = vsel %vm563, %v1395, %v1397
      %v1405 = vsel %vm563, %v1399, %v1401
      %v1414 = vadd.f32 %v1158, %v1387
      %v1415 = vadd.f32 %v1159, %v1402
      %v1416 = vadd.f32 %v1160, %v1391
      %v1417 = vadd.f32 %v1161, %v1403
      %v1418 = vadd.f32 %v1162, %v1395
      %v1419 = vadd.f32 %v1163, %v1404
      %v1420 = vadd.f32 %v1164, %v1399
      %v1421 = vadd.f32 %v1165, %v1405
      %1422 = vset.pattern.permute.xlu0 8
      %1423 = vperm.xlu0 %1422, %v1054
      %v1424 = vpop.permute.xlu0 %1423
      %1426 = vset.pattern.permute.xlu0 8
      %1427 = vperm.xlu0 %1426, %v1055
      %v1428 = vpop.permute.xlu0 %1427
      %1430 = vset.pattern.permute.xlu0 8
      %1431 = vperm.xlu0 %1430, %v1056
      %v1432 = vpop.permute.xlu0 %1431
      %1434 = vset.pattern.permute.xlu0 8
      %1435 = vperm.xlu0 %1434, %v1057
      %v1436 = vpop.permute.xlu0 %1435
      %v1438 = vmul.f32 %v1210, %v1424
      %v1439 = vmul.f32 %v1211, %v1424
      %v1440 = vmul.f32 %v1212, %v1428
      %v1441 = vmul.f32 %v1213, %v1428
      %v1442 = vmul.f32 %v1214, %v1432
      %v1443 = vmul.f32 %v1215, %v1432
      %v1444 = vmul.f32 %v1216, %v1436
      %v1445 = vmul.f32 %v1217, %v1436
      %1454 = vrot.lane.b32.xlu0 %v1438, 120
      %v1455 = vpop.permute.xlu0 %1454
      %1456 = vrot.lane.b32.xlu0 %v1439, 120
      %v1457 = vpop.permute.xlu0 %1456
      %1458 = vrot.lane.b32.xlu0 %v1440, 120
      %v1459 = vpop.permute.xlu0 %1458
      %1460 = vrot.lane.b32.xlu0 %v1441, 120
      %v1461 = vpop.permute.xlu0 %1460
      %1462 = vrot.lane.b32.xlu0 %v1442, 120
      %v1463 = vpop.permute.xlu0 %1462
      %1464 = vrot.lane.b32.xlu0 %v1443, 120
      %v1465 = vpop.permute.xlu0 %1464
      %1466 = vrot.lane.b32.xlu0 %v1444, 120
      %v1467 = vpop.permute.xlu0 %1466
      %1468 = vrot.lane.b32.xlu0 %v1445, 120
      %v1469 = vpop.permute.xlu0 %1468
      %v1470 = vsel %vm666, %v1455, %v1457
      %v1471 = vsel %vm666, %v1459, %v1461
      %v1472 = vsel %vm666, %v1463, %v1465
      %v1473 = vsel %vm666, %v1467, %v1469
      %v1482 = vadd.f32 %v1202, %v1455
      %v1483 = vadd.f32 %v1203, %v1470
      %v1484 = vadd.f32 %v1204, %v1459
      %v1485 = vadd.f32 %v1205, %v1471
      %v1486 = vadd.f32 %v1206, %v1463
      %v1487 = vadd.f32 %v1207, %v1472
      %v1488 = vadd.f32 %v1208, %v1467
      %v1489 = vadd.f32 %v1209, %v1473
      %1498 = vrot.lane.b32.xlu0 %v1278, 127
      %v1499 = vpop.permute.xlu0 %1498
      %1500 = vrot.lane.b32.xlu0 %v1279, 127
      %v1501 = vpop.permute.xlu0 %1500
      %1502 = vrot.lane.b32.xlu0 %v1280, 127
      %v1503 = vpop.permute.xlu0 %1502
      %1504 = vrot.lane.b32.xlu0 %v1281, 127
      %v1505 = vpop.permute.xlu0 %1504
      %1506 = vrot.lane.b32.xlu0 %v1282, 127
      %v1507 = vpop.permute.xlu0 %1506
      %1508 = vrot.lane.b32.xlu0 %v1283, 127
      %v1509 = vpop.permute.xlu0 %1508
      %1510 = vrot.lane.b32.xlu0 %v1284, 127
      %v1511 = vpop.permute.xlu0 %1510
      %1512 = vrot.lane.b32.xlu0 %v1285, 127
      %v1513 = vpop.permute.xlu0 %1512
      %v1514 = vsel %vm689, %v1499, %v1501
      %v1515 = vsel %vm689, %v1503, %v1505
      %v1516 = vsel %vm689, %v1507, %v1509
      %v1517 = vsel %vm689, %v1511, %v1513
      %v1526 = vadd.f32 %v1482, %v1514
      %v1527 = vadd.f32 %v1483, %v1501
      %v1528 = vadd.f32 %v1484, %v1515
      %v1529 = vadd.f32 %v1485, %v1505
      %v1530 = vadd.f32 %v1486, %v1516
      %v1531 = vadd.f32 %v1487, %v1509
      %v1532 = vadd.f32 %v1488, %v1517
      %v1533 = vadd.f32 %v1489, %v1513
      %1542 = vrot.lane.b32.xlu0 %v1346, 126
      %v1543 = vpop.permute.xlu0 %1542
      %1544 = vrot.lane.b32.xlu0 %v1347, 126
      %v1545 = vpop.permute.xlu0 %1544
      %1546 = vrot.lane.b32.xlu0 %v1348, 126
      %v1547 = vpop.permute.xlu0 %1546
      %1548 = vrot.lane.b32.xlu0 %v1349, 126
      %v1549 = vpop.permute.xlu0 %1548
      %1550 = vrot.lane.b32.xlu0 %v1350, 126
      %v1551 = vpop.permute.xlu0 %1550
      %1552 = vrot.lane.b32.xlu0 %v1351, 126
      %v1553 = vpop.permute.xlu0 %1552
      %1554 = vrot.lane.b32.xlu0 %v1352, 126
      %v1555 = vpop.permute.xlu0 %1554
      %1556 = vrot.lane.b32.xlu0 %v1353, 126
      %v1557 = vpop.permute.xlu0 %1556
      %v1558 = vsel %vm712, %v1543, %v1545
      %v1559 = vsel %vm712, %v1547, %v1549
      %v1560 = vsel %vm712, %v1551, %v1553
      %v1561 = vsel %vm712, %v1555, %v1557
      %v1570 = vadd.f32 %v1526, %v1558
      %v1571 = vadd.f32 %v1527, %v1545
      %v1572 = vadd.f32 %v1528, %v1559
      %v1573 = vadd.f32 %v1529, %v1549
      %v1574 = vadd.f32 %v1530, %v1560
      %v1575 = vadd.f32 %v1531, %v1553
      %v1576 = vadd.f32 %v1532, %v1561
      %v1577 = vadd.f32 %v1533, %v1557
      %1586 = vrot.lane.b32.xlu0 %v1414, 125
      %v1587 = vpop.permute.xlu0 %1586
      %1588 = vrot.lane.b32.xlu0 %v1415, 125
      %v1589 = vpop.permute.xlu0 %1588
      %1590 = vrot.lane.b32.xlu0 %v1416, 125
      %v1591 = vpop.permute.xlu0 %1590
      %1592 = vrot.lane.b32.xlu0 %v1417, 125
      %v1593 = vpop.permute.xlu0 %1592
      %1594 = vrot.lane.b32.xlu0 %v1418, 125
      %v1595 = vpop.permute.xlu0 %1594
      %1596 = vrot.lane.b32.xlu0 %v1419, 125
      %v1597 = vpop.permute.xlu0 %1596
      %1598 = vrot.lane.b32.xlu0 %v1420, 125
      %v1599 = vpop.permute.xlu0 %1598
      %1600 = vrot.lane.b32.xlu0 %v1421, 125
      %v1601 = vpop.permute.xlu0 %1600
      %v1602 = vsel %vm735, %v1587, %v1589
      %v1603 = vsel %vm735, %v1591, %v1593
      %v1604 = vsel %vm735, %v1595, %v1597
      %v1605 = vsel %vm735, %v1599, %v1601
      %v1614 = vadd.f32 %v1570, %v1602
      %v1615 = vadd.f32 %v1571, %v1589
      %v1616 = vadd.f32 %v1572, %v1603
      %v1617 = vadd.f32 %v1573, %v1593
      %v1618 = vadd.f32 %v1574, %v1604
      %v1619 = vadd.f32 %v1575, %v1597
      %v1620 = vadd.f32 %v1576, %v1605
      %v1621 = vadd.f32 %v1577, %v1601
      %v1622 = vld [vmem:[%s6] sm:$0xff]
      %v1623 = vld [vmem:[%s6 + $0x8] sm:$0xff]
      %v1624 = vld [vmem:[%s6 + $0x10] sm:$0xff]
      %v1625 = vld [vmem:[%s6 + $0x18] sm:$0xff]
      %1627 = vset.pattern.permute.xlu0 0
      %1628 = vperm.xlu0 %1627, %v1622
      %v1629 = vpop.permute.xlu0 %1628
      %1632 = vset.pattern.permute.xlu0 0
      %1633 = vperm.xlu0 %1632, %v1623
      %v1634 = vpop.permute.xlu0 %1633
      %1637 = vset.pattern.permute.xlu0 0
      %1638 = vperm.xlu0 %1637, %v1624
      %v1639 = vpop.permute.xlu0 %1638
      %1642 = vset.pattern.permute.xlu0 0
      %1643 = vperm.xlu0 %1642, %v1625
      %v1644 = vpop.permute.xlu0 %1643
      %v1646 = vadd.f32 %v1614, %v1629
      %v1647 = vadd.f32 %v1615, %v1629
      %v1648 = vadd.f32 %v1616, %v1634
      %v1649 = vadd.f32 %v1617, %v1634
      %v1650 = vadd.f32 %v1618, %v1639
      %v1651 = vadd.f32 %v1619, %v1639
      %v1652 = vadd.f32 %v1620, %v1644
      %v1653 = vadd.f32 %v1621, %v1644
      %v1654 = vld [vmem:[%s7] sm:$0xff]
      %v1655 = vld [vmem:[%s8] sm:$0xff]
      %1657 = vset.pattern.permute.xlu0 0
      %1658 = vperm.xlu0 %1657, %v1655
      %v1659 = vpop.permute.xlu0 %1658
      %1669 = vrot.lane.b32.xlu0 %v1646, 4
      %v1670 = vpop.permute.xlu0 %1669
      %1671 = vrot.lane.b32.xlu0 %v1647, 4
      %v1672 = vpop.permute.xlu0 %1671
      %1673 = vrot.lane.b32.xlu0 %v1648, 4
      %v1674 = vpop.permute.xlu0 %1673
      %1675 = vrot.lane.b32.xlu0 %v1649, 4
      %v1676 = vpop.permute.xlu0 %1675
      %1677 = vrot.lane.b32.xlu0 %v1650, 4
      %v1678 = vpop.permute.xlu0 %1677
      %1679 = vrot.lane.b32.xlu0 %v1651, 4
      %v1680 = vpop.permute.xlu0 %1679
      %1681 = vrot.lane.b32.xlu0 %v1652, 4
      %v1682 = vpop.permute.xlu0 %1681
      %1683 = vrot.lane.b32.xlu0 %v1653, 4
      %v1684 = vpop.permute.xlu0 %1683
      %v1685 = vsel %vm802, %v1670, %v1672
      %v1686 = vsel %vm802, %v1674, %v1676
      %v1687 = vsel %vm802, %v1678, %v1680
      %v1688 = vsel %vm802, %v1682, %v1684
      %vm1693 = vcmask 261120
      %v1695 = vsel %vm1693, %v1654, 0
      %1697 = vmatpush.msra.mxu0 0.0
      %1698 = vmatpush.msra.mxu0 0.0
      %1699 = vmatpush.msra.mxu0 0.0
      %1700 = vmatpush.msra.mxu0 0.0
      %1701 = vmatpush.msra.mxu0 0.0
      %1702 = vmatpush.msra.mxu0 0.0
      %1703 = vmatpush.msra.mxu0 0.0
      %1704 = vmatpush.msra.mxu0 0.0
      %1705 = vmatpush.msra.mxu0 0.0
      %1706 = vmatpush.msra.mxu0 0.0
      %1707 = vmatpush.msra.mxu0 0.0
      %1708 = vmatpush.msra.mxu0 0.0
      %1709 = vmatpush.msra.mxu0 %v1688
      %1710 = vmatpush.msra.mxu0 %v1687
      %1711 = vmatpush.msra.mxu0 %v1686
      %1712 = vmatpush.msra.mxu0 %v1685
      %1713 = vmatmul.f32.gmra.mxu0 %v1695
      %v1714 = vpop.f32.mrf.mxu0
      %v1715 = vadd.f32 %v1659, %v1714
      %1716 = vdwg.mxu0
      %1717 = vadd.xlane.f32.xlu0 %v1715
      %v1718 = vpop.xlane.xlu0 %1717
      %v1719 = vmul.f32 %v1718, %v865
      %v1720 = vmul.f32 %v1719, 0.015
      %v1721 = vsub.f32 %v1715, %v1720
      %v1722 = vmul.f32 %v1721, %v1721
      %1723 = vadd.xlane.f32.xlu0 %v1722
      %v1724 = vpop.xlane.xlu0 %1723
      %v1725 = vmul.f32 %v1724, %v865
      %v1726 = vmul.f32 %v1725, 0.015
      %v1727 = vadd.f32 %v1726, 0.985
      %v1728 = vrsqrt.pop %v1727
      %v1729 = vmul.f32 %v1728, %v1727
      %v1730 = vmul.f32 %v1729, %v1728
      %v1731 = vmul.f32 0.5, %v1730
      %v1732 = vsub.f32 1.5, %v1731
      %v1733 = vmul.f32 %v1728, %v1732
      %vm1734 = vweird.f32 %v1727
      %vm1735 = vweird.f32 %v1728
      %vm1736 = vmor %vm1734, %vm1735
      %v1737 = vsel %vm1736, %v1728, %v1733
      %v1738 = vmul.f32 %v1721, %v1737
      %v1739 = vld [vmem:[%s11] sm:$0xff]
      %v1740 = vand.u32 2147483647, %v1739
      %1742 = vset.pattern.permute.xlu0 0
      %1743 = vperm.xlu0 %1742, %v1740
      %v1744 = vpop.permute.xlu0 %1743
      %v1746 = vmul.f32 %v1738, %v1744
      %v1747 = vld [vmem:[%s12] sm:$0xff]
      %1749 = vset.pattern.permute.xlu0 0
      %1750 = vperm.xlu0 %1749, %v1747
      %v1751 = vpop.permute.xlu0 %1750
      %v1753 = vadd.f32 %v1746, %v1751
      %v1754 = vmin.f32 %v1753, 0.0
      %v1755 = vmul.f32 %v1754, 1.442695
      %v1756 = vpow.pop %v1755
      %v1757 = vsub.f32 %v1756, 1.0
      %v1758 = vmul.f32 %v1757, 1.6732632
      %vm1759 = vcmp.gt.f32.partialorder %v1753, 0.0
      %v1760 = vsel %vm1759, %v1753, %v1758
      %v1761 = vmul.f32 %v1760, 1.050701
      %1762 = vst [vmem:[%s440] sm:$0xff] %v1761
      %1763 = vst [vmem:[%s440 + $0x8] sm:$0xff] %v441
      %1764 = vst [vmem:[%s440 + $0x10] sm:$0xf] %v442
      %p1765 = scmp.lt.s32.totalorder %s24, 7
      %s1766 = scalar_select %p1765, %s24, 7
      %s1767 = smul.addr %s1766, 3
      %s1768 = smul.addr %s1767, 8
      %s1769 = scalar_lea.vmem %s13, %s1768
      // Predicated region
      $region73: #{tpu_custom_call.1} parent=71 // pred_check
        %p1770 = pneg %p320
      $region74: #{tpu_custom_call.1} parent=71 // pred_check_branch
        %1772 = sbr.rel (%p1770) target = $region76
      $region75: #{tpu_custom_call.1} parent=71 // pred_region
        _
      $region76: #{tpu_custom_call.1} parent=71 // pred_fallthru
        _
    $region72: #{tpu_custom_call.1} parent=5 // pred_fallthru
      _
    %p1773 = scmp.le.s32.totalorder 2, %s19
    // Predicated region
    $region77: #{tpu_custom_call.1} parent=5 // pred_check
      %p1774 = pneg %p1773
    $region78: #{tpu_custom_call.1} parent=5 // pred_check_branch
      %1776 = sbr.rel (%p1774) target = $region80
    $region79: #{tpu_custom_call.1} parent=5 // pred_region
      %s1777 = ssub.s32 %s19, 2
      // Predicated region
      $region81: #{tpu_custom_call.1} parent=79 // pred_check
        %p1778 = pneg %p326
      $region82: #{tpu_custom_call.1} parent=79 // pred_check_branch
        %1780 = sbr.rel (%p1778) target = $region84
      $region83: #{tpu_custom_call.1} parent=79 // pred_region
        %p1781 = scmp.lt.s32.totalorder %s25, 7
        %s1782 = scalar_select %p1781, %s25, 7
        %s1783 = smul.addr %s1782, 3
        %s1784 = smul.addr %s1783, 8
        %s1785 = scalar_lea.vmem %s13, %s1784
      $region84: #{tpu_custom_call.1} parent=79 // pred_fallthru
        _
    $region80: #{tpu_custom_call.1} parent=5 // pred_fallthru
      _
  $region6: #{tpu_custom_call.1} parent=0 // loop_footer
    %s23 = sadd.s32 1, %s19
  $region7: #{tpu_custom_call.1} parent=0 // loop_footer_branch
    %18 = sbr.rel target = $region3
  $region8: #{tpu_custom_call.1} parent=0 // loop_exit
    _

</llo_original>
